<compile_context>
chip_gen: v7x
topology: tpu7x:2x2x1
jax: 0.10.0
libtpu: 0.0.40
codegen_flags: <defaults>
</compile_context>

<pallas_src>
import functools

import jax
import jax.numpy as jnp
from jax import lax
from jax.experimental import pallas as pl
from jax.experimental.pallas import tpu as pltpu


# ---------------------------------------------------------------------------
# Spectral channel mixing:  out[b, o, m] = sum_i x[b, i, m] * w[i, o, m]
# (complex), executed on the MXU via the real embedding.
# ---------------------------------------------------------------------------

def _spectral_mix_kernel(x_ref, w_ref, o_ref):
    """Batched (over kept modes) real-embedded complex matmul.

    x_ref : (TM, TB, 2*Cin)     per mode: [xr | xi]
    w_ref : (TM, 2*Cin, 2*Cout) per mode: [[Wr, Wi], [-Wi, Wr]]
    o_ref : (TM, TB, 2*Cout)    per mode: [out_r | out_i]  (single store)
    """
    o_ref[...] = lax.dot_general(
        x_ref[...], w_ref[...],
        dimension_numbers=(((2,), (1,)), ((0,), (0,))),
        preferred_element_type=jnp.float32,
    ).astype(o_ref.dtype)


def _choose_mode_tile(padded_modes):
    for cand in (64, 32, 16, 8, 4, 2):
        if padded_modes % cand == 0 and padded_modes // cand >= 2:
            return cand
    return padded_modes


def _choose_batch_tile(batch):
    for cand in (8, 4, 2):
        if batch % cand == 0 and batch > cand:
            return cand
    return batch


def _spectral_mix_pallas(x_emb, w_emb):
    """x_emb: (Mp, B, 2*Cin) f32; w_emb: (Mp, 2*Cin, 2*Cout) f32 -> (Mp, B, 2*Cout)."""
    mp, b, k2 = x_emb.shape
    n2 = w_emb.shape[2]

    tm = _choose_mode_tile(mp)
    tb = _choose_batch_tile(b)
    grid = (mp // tm, b // tb)

    # Weight index_map ignores the (minor) batch grid axis -> the same weight
    # tile is reused across consecutive batch steps without re-DMA.
    x_spec = pl.BlockSpec((tm, tb, k2), lambda m, bb: (m, bb, 0))
    w_spec = pl.BlockSpec((tm, k2, n2), lambda m, bb: (m, 0, 0))
    o_spec = pl.BlockSpec((tm, tb, n2), lambda m, bb: (m, bb, 0))

    # Per-step VMEM footprint (double-buffered by the pipeline); keep headroom
    # but stay well under v7x's 64 MiB physical VMEM.
    step_bytes = 4 * (tm * tb * k2 + tm * k2 * n2 + tm * tb * n2)
    vmem_limit = int(min(32 * 1024 * 1024, max(4 * step_bytes, 16 * 1024 * 1024)))

    cost = pl.CostEstimate(
        flops=2 * mp * b * k2 * n2,
        transcendentals=0,
        bytes_accessed=4 * (mp * b * k2 + mp * k2 * n2 + mp * b * n2),
    )

    return pl.pallas_call(
        _spectral_mix_kernel,
        grid=grid,
        in_specs=[x_spec, w_spec],
        out_specs=o_spec,
        out_shape=jax.ShapeDtypeStruct((mp, b, n2), jnp.float32),
        compiler_params=pltpu.CompilerParams(
            dimension_semantics=("parallel", "parallel"),
            vmem_limit_bytes=vmem_limit,
        ),
        cost_estimate=cost,
    )(x_emb, w_emb)


def pack_spectral_weights(w1, w2, mode_pad=8):
    """One-time weight packing (hoisted out of the forward pass).

    w1, w2 : (Cin, Cout, modes1, modes2) complex64 (low-row / high-row corners)
    returns  (Mp, 2*Cin, 2*Cout) float32, Mp = 2*modes1*modes2 rounded up to a
    multiple of `mode_pad`.  Per mode the matrix is [[Wr, Wi], [-Wi, Wr]].
    """
    cin, cout, m1, m2 = w1.shape
    m = m1 * m2
    wc = jnp.concatenate(
        [w1.reshape(cin, cout, m), w2.reshape(cin, cout, m)], axis=-1)  # (Cin,Cout,2M)
    wm = jnp.transpose(wc, (2, 0, 1))                                    # (2M,Cin,Cout)
    wr = jnp.real(wm).astype(jnp.float32)
    wi = jnp.imag(wm).astype(jnp.float32)
    top = jnp.concatenate([wr, wi], axis=-1)                             # (2M,Cin,2Cout)
    bot = jnp.concatenate([-wi, wr], axis=-1)
    w_emb = jnp.concatenate([top, bot], axis=1)                          # (2M,2Cin,2Cout)
    total = 2 * m
    padded = ((total + mode_pad - 1) // mode_pad) * mode_pad
    if padded > total:
        w_emb = jnp.pad(w_emb, ((0, padded - total), (0, 0), (0, 0)))
    return w_emb


def spectral_conv2d(x, w_packed, modes1, modes2):
    """SpectralConv2d_fast forward.  x: (B, Cin, H, W) f32, w_packed from pack_spectral_weights."""
    b, cin, h, w = x.shape
    cout = w_packed.shape[2] // 2
    wf = w // 2 + 1
    m = modes1 * modes2
    mp = w_packed.shape[0]

    # TODO(synk): rfft2 / irfft2 have no Pallas primitive; they stay in jnp.fft.
    x_ft = jnp.fft.rfft2(x, norm="ortho")                      # (B, Cin, H, Wf) c64

    x1 = x_ft[:, :, :modes1, :modes2].reshape(b, cin, m)       # low-frequency rows
    x2 = x_ft[:, :, h - modes1:, :modes2].reshape(b, cin, m)   # high-frequency rows
    xc = jnp.concatenate([x1, x2], axis=-1)                    # (B, Cin, 2M)
    xm = jnp.transpose(xc, (2, 0, 1))                          # (2M, B, Cin)
    x_emb = jnp.concatenate(
        [jnp.real(xm), jnp.imag(xm)], axis=-1).astype(jnp.float32)  # (2M, B, 2Cin)
    if mp > 2 * m:
        x_emb = jnp.pad(x_emb, ((0, mp - 2 * m), (0, 0), (0, 0)))

    out = _spectral_mix_pallas(x_emb, w_packed)                # (Mp, B, 2Cout)
    out = out[:2 * m]
    out_c = out[:, :, :cout] + 1j * out[:, :, cout:]           # (2M, B, Cout) c64
    out_c = jnp.transpose(out_c, (1, 2, 0))                    # (B, Cout, 2M)

    out_ft = jnp.zeros((b, cout, h, wf), dtype=jnp.complex64)
    out_ft = out_ft.at[:, :, :modes1, :modes2].set(
        out_c[:, :, :m].reshape(b, cout, modes1, modes2))
    out_ft = out_ft.at[:, :, h - modes1:, :modes2].set(
        out_c[:, :, m:].reshape(b, cout, modes1, modes2))
    return jnp.fft.irfft2(out_ft, s=(h, w), norm="ortho").astype(jnp.float32)


# ---------------------------------------------------------------------------
# 1x1 Conv1d channel mixer (w0..w3) as a lane-dense MXU matmul.
# ---------------------------------------------------------------------------

def _pointwise_conv_kernel(x_ref, w_ref, b_ref, o_ref):
    # x_ref: (1, Cin, TL); w_ref: (Cout, Cin); b_ref: (Cout, 1); o_ref: (1, Cout, TL)
    o_ref[0] = (jnp.dot(w_ref[...], x_ref[0], preferred_element_type=jnp.float32)
                + b_ref[...]).astype(o_ref.dtype)


def pointwise_conv1d(x, w, bias):
    """nn.Conv1d(C, C, kernel_size=1).  x: (B, Cin, H, W); w: (Cout, Cin); bias: (Cout,)."""
    b, cin, h, wdim = x.shape
    cout = w.shape[0]
    l = h * wdim
    xf = x.reshape(b, cin, l)
    tl = 128 if l % 128 == 0 else l          # lane-dense spatial tile when possible
    grid = (b, l // tl)

    cost = pl.CostEstimate(
        flops=2 * b * cout * cin * l,
        transcendentals=0,
        bytes_accessed=4 * (b * cin * l + cout * cin + cout + b * cout * l),
    )

    out = pl.pallas_call(
        _pointwise_conv_kernel,
        grid=grid,
        in_specs=[
            pl.BlockSpec((1, cin, tl), lambda i, j: (i, 0, j)),
            pl.BlockSpec((cout, cin), lambda i, j: (0, 0)),
            pl.BlockSpec((cout, 1), lambda i, j: (0, 0)),
        ],
        out_specs=pl.BlockSpec((1, cout, tl), lambda i, j: (i, 0, j)),
        out_shape=jax.ShapeDtypeStruct((b, cout, l), jnp.float32),
        compiler_params=pltpu.CompilerParams(
            dimension_semantics=("parallel", "parallel")),
        cost_estimate=cost,
    )(xf, w, bias.reshape(cout, 1))
    return out.reshape(b, cout, h, wdim)


# ---------------------------------------------------------------------------
# Plain-JAX glue (BatchNorm, Linear layers) and the full SimpleBlock2d forward.
# ---------------------------------------------------------------------------

def batchnorm2d(x, gamma, beta, eps=1e-5):
    # TODO(synk): training-mode batch statistics (matches nn.BatchNorm2d default
    # forward in train()); cheap reduction, kept as plain-JAX glue.
    mean = jnp.mean(x, axis=(0, 2, 3), keepdims=True)
    var = jnp.mean(jnp.square(x - mean), axis=(0, 2, 3), keepdims=True)
    xn = (x - mean) * lax.rsqrt(var + eps)
    return xn * gamma.reshape(1, -1, 1, 1) + beta.reshape(1, -1, 1, 1)


def simple_block2d_forward(x, params, modes1, modes2):
    """Pallas-backed forward of SimpleBlock2d.  x: (B, H, W, 12) f32 -> (B, H, W, 1)."""
    h = x @ params["fc0_w"] + params["fc0_b"]          # (B, H, W, width)
    h = jnp.transpose(h, (0, 3, 1, 2))                 # (B, width, H, W)
    for i in range(4):
        x1 = spectral_conv2d(h, params[f"conv{i}_packed"], modes1, modes2)
        x2 = pointwise_conv1d(h, params[f"w{i}_w"], params[f"w{i}_b"])
        h = batchnorm2d(x1 + x2, params[f"bn{i}_gamma"], params[f"bn{i}_beta"])
        if i < 3:
            h = jax.nn.relu(h)
    h = jnp.transpose(h, (0, 2, 3, 1))                 # (B, H, W, width)
    h = jax.nn.relu(h @ params["fc1_w"] + params["fc1_b"])
    return h @ params["fc2_w"] + params["fc2_b"]       # (B, H, W, 1)


def _reference_forward(x, params, modes1, modes2):
    """Pure-JAX reference mirroring the PyTorch module exactly (no Pallas)."""
    hi = lax.Precision.HIGHEST

    def spectral_ref(h, w1, w2):
        b, cin, hh, ww = h.shape
        cout = w1.shape[1]
        h_ft = jnp.fft.rfft2(h, norm="ortho")
        out_ft = jnp.zeros((b, cout, hh, ww // 2 + 1), dtype=jnp.complex64)
        out_ft = out_ft.at[:, :, :modes1, :modes2].set(
            jnp.einsum("bixy,ioxy->boxy", h_ft[:, :, :modes1, :modes2], w1,
                       precision=hi))
        out_ft = out_ft.at[:, :, hh - modes1:, :modes2].set(
            jnp.einsum("bixy,ioxy->boxy", h_ft[:, :, hh - modes1:, :modes2], w2,
                       precision=hi))
        return jnp.fft.irfft2(out_ft, s=(hh, ww), norm="ortho")

    h = x @ params["fc0_w"] + params["fc0_b"]
    h = jnp.transpose(h, (0, 3, 1, 2))
    for i in range(4):
        x1 = spectral_ref(h, params[f"conv{i}_w1"], params[f"conv{i}_w2"])
        x2 = (jnp.einsum("oi,bihw->bohw", params[f"w{i}_w"], h, precision=hi)
              + params[f"w{i}_b"].reshape(1, -1, 1, 1))
        h = batchnorm2d(x1 + x2, params[f"bn{i}_gamma"], params[f"bn{i}_beta"])
        if i < 3:
            h = jax.nn.relu(h)
    h = jnp.transpose(h, (0, 2, 3, 1))
    h = jax.nn.relu(h @ params["fc1_w"] + params["fc1_b"])
    return h @ params["fc2_w"] + params["fc2_b"]


if __name__ == "__main__":
    # Small shapes consistent with SimpleBlock2d: input (B, H, W, 12), width=20.
    B, H, W = 2, 16, 16
    in_feat, width = 12, 20
    modes1 = modes2 = 4

    key = jax.random.PRNGKey(0)
    keys = iter(jax.random.split(key, 64))

    def nrm(shape, scale=1.0):
        return scale * jax.random.normal(next(keys), shape, dtype=jnp.float32)

    params = {
        "fc0_w": nrm((in_feat, width), 0.1), "fc0_b": nrm((width,), 0.1),
        "fc1_w": nrm((width, 128), 0.1),     "fc1_b": nrm((128,), 0.1),
        "fc2_w": nrm((128, 1), 0.1),         "fc2_b": nrm((1,), 0.1),
    }
    scale = 1.0 / (width * width)
    wshape = (width, width, modes1, modes2)
    for i in range(4):
        w1 = (scale * (nrm(wshape) + 1j * nrm(wshape))).astype(jnp.complex64)
        w2 = (scale * (nrm(wshape) + 1j * nrm(wshape))).astype(jnp.complex64)
        params[f"conv{i}_w1"] = w1
        params[f"conv{i}_w2"] = w2
        # Hoisted out of the forward pass: pack the real-embedded weights once.
        params[f"conv{i}_packed"] = pack_spectral_weights(w1, w2)
        params[f"w{i}_w"] = nrm((width, width), 0.2)
        params[f"w{i}_b"] = nrm((width,), 0.2)
        params[f"bn{i}_gamma"] = jnp.ones((width,), jnp.float32)
        params[f"bn{i}_beta"] = jnp.zeros((width,), jnp.float32)

    x = jax.random.normal(next(keys), (B, H, W, in_feat), dtype=jnp.float32)

    fwd = jax.jit(functools.partial(simple_block2d_forward,
                                    modes1=modes1, modes2=modes2))
    out = jax.block_until_ready(fwd(x, params))

    ref = jax.block_until_ready(_reference_forward(x, params, modes1, modes2))

    assert out.shape == (B, H, W, 1), out.shape
    assert jnp.allclose(out, ref, atol=1e-3, rtol=1e-3), \
        float(jnp.max(jnp.abs(out - ref)))

    print("KERNEL_OK")
</pallas_src>

<mosaic_0001>
module attributes {stable_mosaic.version = 11 : i64} {
  func.func @_spectral_mix_kernel(%arg0: i32, %arg1: i32, %arg2: memref<16x2x40xf32, #tpu.memory_space<vmem>>, %arg3: memref<16x40x40xf32, #tpu.memory_space<vmem>>, %arg4: memref<16x2x40xf32, #tpu.memory_space<vmem>>) attributes {dimension_semantics = [#tpu.dimension_semantics<parallel>, #tpu.dimension_semantics<parallel>], iteration_bounds = array<i64: 2, 1>, scalar_prefetch = 0 : i64, scratch_operands = 0 : i64, tpu.core_type = #tpu.core_type<tc>, window_params = [{transform_indices = @transform_0, window_bounds = array<i64: 16, 2, 40>}, {transform_indices = @transform_1, window_bounds = array<i64: 16, 40, 40>}, {transform_indices = @transform_2, window_bounds = array<i64: 16, 2, 40>}]} {
    %c0 = arith.constant 0 : index
    %c0_0 = arith.constant 0 : index
    %c0_1 = arith.constant 0 : index
    %0 = vector.load %arg2[%c0, %c0_0, %c0_1] : memref<16x2x40xf32, #tpu.memory_space<vmem>>, vector<16x2x40xf32>
    %c0_2 = arith.constant 0 : index
    %c0_3 = arith.constant 0 : index
    %c0_4 = arith.constant 0 : index
    %1 = vector.load %arg3[%c0_2, %c0_3, %c0_4] : memref<16x40x40xf32, #tpu.memory_space<vmem>>, vector<16x40x40xf32>
    %cst = arith.constant dense<0.000000e+00> : vector<16x2x40xf32>
    %2 = tpu.matmul %0, %1, %cst {dimension_numbers = #tpu.dot_dimension_numbers<[2], [1], [1], [2], [0, 0, 0, 1, 1, 2], [0], [0]>} : vector<16x2x40xf32>, vector<16x40x40xf32>, vector<16x2x40xf32> -> vector<16x2x40xf32>
    %c0_5 = arith.constant 0 : index
    %c0_6 = arith.constant 0 : index
    %c0_7 = arith.constant 0 : index
    %3 = vector.load %arg4[%c0_5, %c0_6, %c0_7] : memref<16x2x40xf32, #tpu.memory_space<vmem>>, vector<16x2x40xf32>
    tpu.vector_store %arg4[%c0_5, %c0_6, %c0_7], %2 {strides = array<i32>} : memref<16x2x40xf32, #tpu.memory_space<vmem>>, vector<16x2x40xf32>,
    return
  }
  func.func @transform_0(%arg0: i32, %arg1: i32) -> (i32, i32, i32) {
    %c0_i32 = arith.constant 0 : i32
    %c0_i32_0 = arith.constant 0 : i32
    return %arg0, %arg1, %c0_i32 : i32, i32, i32
  }
  func.func @transform_1(%arg0: i32, %arg1: i32) -> (i32, i32, i32) {
    %c0_i32 = arith.constant 0 : i32
    %c0_i32_0 = arith.constant 0 : i32
    %c0_i32_1 = arith.constant 0 : i32
    return %arg0, %c0_i32, %c0_i32_0 : i32, i32, i32
  }
  func.func @transform_2(%arg0: i32, %arg1: i32) -> (i32, i32, i32) {
    %c0_i32 = arith.constant 0 : i32
    %c0_i32_0 = arith.constant 0 : i32
    return %arg0, %arg1, %c0_i32 : i32, i32, i32
  }
}

module attributes {stable_mosaic.version = 11 : i64} {
  func.func @_pointwise_conv_kernel(%arg0: i32, %arg1: i32, %arg2: memref<1x20x128xf32, #tpu.memory_space<vmem>>, %arg3: memref<20x20xf32, #tpu.memory_space<vmem>>, %arg4: memref<20x1xf32, #tpu.memory_space<vmem>>, %arg5: memref<1x20x128xf32, #tpu.memory_space<vmem>>) attributes {dimension_semantics = [#tpu.dimension_semantics<parallel>, #tpu.dimension_semantics<parallel>], iteration_bounds = array<i64: 2, 2>, scalar_prefetch = 0 : i64, scratch_operands = 0 : i64, tpu.core_type = #tpu.core_type<tc>, window_params = [{transform_indices = @transform_0, window_bounds = array<i64: 1, 20, 128>}, {pipeline_mode = #tpu.pipeline_mode<synchronous>, transform_indices = @transform_1, window_bounds = array<i64: 20, 20>}, {pipeline_mode = #tpu.pipeline_mode<synchronous>, transform_indices = @transform_2, window_bounds = array<i64: 20, 1>}, {transform_indices = @transform_3, window_bounds = array<i64: 1, 20, 128>}]} {
    %c0 = arith.constant 0 : index
    %c0_0 = arith.constant 0 : index
    %0 = vector.load %arg3[%c0, %c0_0] : memref<20x20xf32, #tpu.memory_space<vmem>>, vector<20x20xf32>
    %c0_1 = arith.constant 0 : index
    %c0_2 = arith.constant 0 : index
    %c0_3 = arith.constant 0 : index
    %1 = vector.load %arg2[%c0_1, %c0_2, %c0_3] : memref<1x20x128xf32, #tpu.memory_space<vmem>>, vector<1x20x128xf32>
    %2 = vector.shape_cast %1 : vector<1x20x128xf32> to vector<20x128xf32>
    %cst = arith.constant dense<0.000000e+00> : vector<20x128xf32>
    %3 = tpu.matmul %0, %2, %cst {dimension_numbers = #tpu.dot_dimension_numbers<[1], [0], [0], [1], [0, 0, 1, 1], [], []>} : vector<20x20xf32>, vector<20x128xf32>, vector<20x128xf32> -> vector<20x128xf32>
    %c0_4 = arith.constant 0 : index
    %c0_5 = arith.constant 0 : index
    %4 = vector.load %arg4[%c0_4, %c0_5] : memref<20x1xf32, #tpu.memory_space<vmem>>, vector<20x1xf32>
    %5 = vector.broadcast %4 : vector<20x1xf32> to vector<20x128xf32>
    %6 = arith.addf %3, %5 : vector<20x128xf32>
    %c0_6 = arith.constant 0 : index
    %c0_7 = arith.constant 0 : index
    %c0_8 = arith.constant 0 : index
    %7 = vector.load %arg5[%c0_6, %c0_7, %c0_8] : memref<1x20x128xf32, #tpu.memory_space<vmem>>, vector<1x20x128xf32>
    %8 = vector.shape_cast %7 : vector<1x20x128xf32> to vector<20x128xf32>
    %9 = vector.shape_cast %6 : vector<20x128xf32> to vector<1x20x128xf32>
    tpu.vector_store %arg5[%c0_6, %c0_7, %c0_8], %9 {strides = array<i32>} : memref<1x20x128xf32, #tpu.memory_space<vmem>>, vector<1x20x128xf32>,
    return
  }
  func.func @transform_0(%arg0: i32, %arg1: i32) -> (i32, i32, i32) {
    %c0_i32 = arith.constant 0 : i32
    %c0_i32_0 = arith.constant 0 : i32
    return %arg0, %c0_i32, %arg1 : i32, i32, i32
  }
  func.func @transform_1(%arg0: i32, %arg1: i32) -> (i32, i32) {
    %c0_i32 = arith.constant 0 : i32
    %c0_i32_0 = arith.constant 0 : i32
    %c0_i32_1 = arith.constant 0 : i32
    return %c0_i32, %c0_i32_0 : i32, i32
  }
  func.func @transform_2(%arg0: i32, %arg1: i32) -> (i32, i32) {
    %c0_i32 = arith.constant 0 : i32
    %c0_i32_0 = arith.constant 0 : i32
    %c0_i32_1 = arith.constant 0 : i32
    return %c0_i32, %c0_i32_0 : i32, i32
  }
  func.func @transform_3(%arg0: i32, %arg1: i32) -> (i32, i32, i32) {
    %c0_i32 = arith.constant 0 : i32
    %c0_i32_0 = arith.constant 0 : i32
    return %arg0, %c0_i32, %arg1 : i32, i32, i32
  }
}

</mosaic_0001>

<llo_original>
// kernel: reverse.8
$region0: #{reverse.8}
  #allocation0 [shape = 's32[1]{0}', space=sflag, size = 0x4, scoped, tag = 'scoped memory for reverse.8']
  %s0 = inlined_call_operand.vmem [shape: f32[2,20,16,7], index: 0, kind: input, shape index: {}]
  %s1 = inlined_call_operand.vmem [shape: f32[2,20,16,7], index: 1, kind: output, shape index: {}]
  %s2 = scalar_lea.vmem %s0, 96
  %v3 = vld [vmem:[%s2] sm:$0xff]
  %4 = vst [vmem:[%s1] sm:$0xff] %v3
  %s5 = scalar_lea.vmem %s0, 208
  %v6 = vld [vmem:[%s5] sm:$0xff]
  %s7 = scalar_lea.vmem %s1, 112
  %8 = vst [vmem:[%s7] sm:$0xff] %v6
  %s9 = scalar_lea.vmem %s0, 80
  %v10 = vld [vmem:[%s9] sm:$0xff]
  %s11 = scalar_lea.vmem %s1, 16
  %12 = vst [vmem:[%s11] sm:$0xff] %v10
  %s13 = scalar_lea.vmem %s0, 192
  %v14 = vld [vmem:[%s13] sm:$0xff]
  %s15 = scalar_lea.vmem %s1, 128
  %16 = vst [vmem:[%s15] sm:$0xff] %v14
  %s17 = scalar_lea.vmem %s0, 64
  %v18 = vld [vmem:[%s17] sm:$0xff]
  %s19 = scalar_lea.vmem %s1, 32
  %20 = vst [vmem:[%s19] sm:$0xff] %v18
  %s21 = scalar_lea.vmem %s0, 176
  %v22 = vld [vmem:[%s21] sm:$0xff]
  %s23 = scalar_lea.vmem %s1, 144
  %24 = vst [vmem:[%s23] sm:$0xff] %v22
  %s25 = scalar_lea.vmem %s0, 48
  %v26 = vld [vmem:[%s25] sm:$0xff]
  %s27 = scalar_lea.vmem %s1, 48
  %28 = vst [vmem:[%s27] sm:$0xff] %v26
  %s29 = scalar_lea.vmem %s0, 160
  %v30 = vld [vmem:[%s29] sm:$0xff]
  %s31 = scalar_lea.vmem %s1, 160
  %32 = vst [vmem:[%s31] sm:$0xff] %v30
  %s33 = scalar_lea.vmem %s0, 32
  %v34 = vld [vmem:[%s33] sm:$0xff]
  %s35 = scalar_lea.vmem %s1, 64
  %36 = vst [vmem:[%s35] sm:$0xff] %v34
  %s37 = scalar_lea.vmem %s0, 144
  %v38 = vld [vmem:[%s37] sm:$0xff]
  %s39 = scalar_lea.vmem %s1, 176
  %40 = vst [vmem:[%s39] sm:$0xff] %v38
  %s41 = scalar_lea.vmem %s0, 16
  %v42 = vld [vmem:[%s41] sm:$0xff]
  %s43 = scalar_lea.vmem %s1, 80
  %44 = vst [vmem:[%s43] sm:$0xff] %v42
  %s45 = scalar_lea.vmem %s0, 128
  %v46 = vld [vmem:[%s45] sm:$0xff]
  %s47 = scalar_lea.vmem %s1, 192
  %48 = vst [vmem:[%s47] sm:$0xff] %v46
  %v49 = vld [vmem:[%s0] sm:$0xff]
  %s50 = scalar_lea.vmem %s1, 96
  %51 = vst [vmem:[%s50] sm:$0xff] %v49
  %s52 = scalar_lea.vmem %s0, 112
  %v53 = vld [vmem:[%s52] sm:$0xff]
  %s54 = scalar_lea.vmem %s1, 208
  %55 = vst [vmem:[%s54] sm:$0xff] %v53
  %s56 = scalar_lea.vmem %s0, 104
  %v57 = vld [vmem:[%s56] sm:$0xff]
  %s58 = scalar_lea.vmem %s1, 8
  %59 = vst [vmem:[%s58] sm:$0xff] %v57
  %s60 = scalar_lea.vmem %s0, 216
  %v61 = vld [vmem:[%s60] sm:$0xff]
  %s62 = scalar_lea.vmem %s1, 120
  %63 = vst [vmem:[%s62] sm:$0xff] %v61
  %s64 = scalar_lea.vmem %s0, 88
  %v65 = vld [vmem:[%s64] sm:$0xff]
  %s66 = scalar_lea.vmem %s1, 24
  %67 = vst [vmem:[%s66] sm:$0xff] %v65
  %s68 = scalar_lea.vmem %s0, 200
  %v69 = vld [vmem:[%s68] sm:$0xff]
  %s70 = scalar_lea.vmem %s1, 136
  %71 = vst [vmem:[%s70] sm:$0xff] %v69
  %s72 = scalar_lea.vmem %s0, 72
  %v73 = vld [vmem:[%s72] sm:$0xff]
  %s74 = scalar_lea.vmem %s1, 40
  %75 = vst [vmem:[%s74] sm:$0xff] %v73
  %s76 = scalar_lea.vmem %s0, 184
  %v77 = vld [vmem:[%s76] sm:$0xff]
  %s78 = scalar_lea.vmem %s1, 152
  %79 = vst [vmem:[%s78] sm:$0xff] %v77
  %s80 = scalar_lea.vmem %s0, 56
  %v81 = vld [vmem:[%s80] sm:$0xff]
  %s82 = scalar_lea.vmem %s1, 56
  %83 = vst [vmem:[%s82] sm:$0xff] %v81
  %s84 = scalar_lea.vmem %s0, 168
  %v85 = vld [vmem:[%s84] sm:$0xff]
  %s86 = scalar_lea.vmem %s1, 168
  %87 = vst [vmem:[%s86] sm:$0xff] %v85
  %s88 = scalar_lea.vmem %s0, 40
  %v89 = vld [vmem:[%s88] sm:$0xff]
  %s90 = scalar_lea.vmem %s1, 72
  %91 = vst [vmem:[%s90] sm:$0xff] %v89
  %s92 = scalar_lea.vmem %s0, 152
  %v93 = vld [vmem:[%s92] sm:$0xff]
  %s94 = scalar_lea.vmem %s1, 184
  %95 = vst [vmem:[%s94] sm:$0xff] %v93
  %s96 = scalar_lea.vmem %s0, 24
  %v97 = vld [vmem:[%s96] sm:$0xff]
  %s98 = scalar_lea.vmem %s1, 88
  %99 = vst [vmem:[%s98] sm:$0xff] %v97
  %s100 = scalar_lea.vmem %s0, 136
  %v101 = vld [vmem:[%s100] sm:$0xff]
  %s102 = scalar_lea.vmem %s1, 200
  %103 = vst [vmem:[%s102] sm:$0xff] %v101
  %s104 = scalar_lea.vmem %s0, 8
  %v105 = vld [vmem:[%s104] sm:$0xff]
  %s106 = scalar_lea.vmem %s1, 104
  %107 = vst [vmem:[%s106] sm:$0xff] %v105
  %s108 = scalar_lea.vmem %s0, 120
  %v109 = vld [vmem:[%s108] sm:$0xff]
  %s110 = scalar_lea.vmem %s1, 216
  %111 = vst [vmem:[%s110] sm:$0xff] %v109

// kernel: simple_block2d_forward.8
$region0: #{simple_block2d_forward.8}
  #allocation0 [shape = 'u32[]', space=smem, size = 0x4, offset = 0x4, fixed_abs, tag = 'smem constant byte address 0x4 - core index']
  #allocation1 [shape = 'u32[144,128]{1,0:T(1,128)}', space=vmem, size = 0x12000, scoped, tag = 'internal scratch']
  %s0 = inlined_call_operand.vmem [shape: f32[32,2,40], index: 0, kind: input, shape index: {}]
  %s1 = inlined_call_operand.vmem [shape: f32[32,40,40], index: 1, kind: input, shape index: {}]
  %s2 = inlined_call_operand.vmem [shape: f32[32,2,40], index: 2, kind: output, shape index: {}]
  %s3 = sld [smem:[#allocation0]]
  $region41: #{simple_block2d_forward.8} parent=0
    _
  %s5 = ssub.s32 1, %s3
  %s6 = scalar_select 0, %s5, %s3
  loop: start=0, step=1, limit=4
  $region2: #{simple_block2d_forward.8} parent=0 // loop_pre_header
    _
  $region3: #{simple_block2d_forward.8} parent=0 // loop_header
    %s8 = sphi 0, %s12
    %p9 = scmp.ge.s32.totalorder %s8, 4
    %s15 = sphi 0, %s27
    %s16 = sphi 0, %s23
    %s17 = sphi 0, %s15
    %s18 = sphi 0, %s16
    %s19 = sphi 0, %s17
    %s20 = sphi 0, %s18
    %s32 = sphi 0, %s34
    %s35 = sphi 0, %s32
    %s36 = sphi 0, %s35
    %s52 = sphi 0, %s36
    %s58 = sphi 0, %s60
    %s61 = sphi 0, %s58
    %s62 = sphi 0, %s61
    %s78 = sphi 0, %s62
    %s86 = sphi 0, %s88
    %s89 = sphi 0, %s86
    %s90 = sphi 0, %s89
    %s106 = sphi 0, %s90
  $region4: #{simple_block2d_forward.8} parent=0 // loop_header_branch
    %11 = sbr.rel (%p9) target = $region8
  $region5: #{simple_block2d_forward.8} parent=0 // loop_body
    %s13 = ssub.s32 %s8, 1
    %s14 = ssub.s32 %s8, 2
    %s21 = sadd.s32 1, %s16
    %p22 = scmp.ge.s32.totalorder %s21, 1
    %s23 = scalar_select %p22, 0, %s21
    %s24 = sadd.s32 1, %s15
    %s25 = scalar_select %p22, %s24, %s15
    %p26 = scmp.ge.s32.totalorder %s25, 2
    %s27 = scalar_select %p26, 0, %s25
    %s28 = ssub.s32 %s15, %s27
    %s29 = ssub.s32 %s16, %s23
    %s30 = sor.u32 %s28, %s29
    %p31 = scmp.eq.s32.totalorder %s30, 0
    %s33 = sadd.s32 %s32, 1
    %s34 = scalar_select %p31, %s32, %s33
    %p37 = pneg %p31
    %p38 = scmp.eq.s32.totalorder %s8, 1
    %p39 = por %p37, %p38
    %p40 = scmp.ne.s32.totalorder %s32, %s35
    %p41 = scmp.eq.s32.totalorder %s8, 0
    %p42 = por %p40, %p41
    %p43 = scmp.ne.s32.totalorder %s32, %s35
    %p44 = scmp.eq.s32.totalorder %s13, 1
    %p45 = por %p43, %p44
    %p46 = scmp.ne.s32.totalorder %s35, %s36
    %p47 = scmp.eq.s32.totalorder %s13, 0
    %p48 = por %p46, %p47
    %p49 = scmp.ne.s32.totalorder %s35, %s36
    %p50 = scmp.eq.s32.totalorder %s14, 1
    %p51 = por %p49, %p50
    %p53 = scmp.ne.s32.totalorder %s36, %s52
    %p54 = scmp.eq.s32.totalorder %s14, 0
    %p55 = por %p53, %p54
    %s56 = ssub.s32 %s15, %s27
    %p57 = scmp.eq.s32.totalorder %s56, 0
    %s59 = sadd.s32 %s58, 1
    %s60 = scalar_select %p57, %s58, %s59
    %p63 = pneg %p57
    %p64 = scmp.eq.s32.totalorder %s8, 1
    %p65 = por %p63, %p64
    %p66 = scmp.ne.s32.totalorder %s58, %s61
    %p67 = scmp.eq.s32.totalorder %s8, 0
    %p68 = por %p66, %p67
    %p69 = scmp.ne.s32.totalorder %s58, %s61
    %p70 = scmp.eq.s32.totalorder %s13, 1
    %p71 = por %p69, %p70
    %p72 = scmp.ne.s32.totalorder %s61, %s62
    %p73 = scmp.eq.s32.totalorder %s13, 0
    %p74 = por %p72, %p73
    %p75 = scmp.ne.s32.totalorder %s61, %s62
    %p76 = scmp.eq.s32.totalorder %s14, 1
    %p77 = por %p75, %p76
    %p79 = scmp.ne.s32.totalorder %s62, %s78
    %p80 = scmp.eq.s32.totalorder %s14, 0
    %p81 = por %p79, %p80
    %s82 = ssub.s32 %s15, %s27
    %s83 = ssub.s32 %s16, %s23
    %s84 = sor.u32 %s82, %s83
    %p85 = scmp.eq.s32.totalorder %s84, 0
    %s87 = sadd.s32 %s86, 1
    %s88 = scalar_select %p85, %s86, %s87
    %p91 = pneg %p85
    %p92 = scmp.eq.s32.totalorder %s8, 1
    %p93 = por %p91, %p92
    %p94 = scmp.ne.s32.totalorder %s86, %s89
    %p95 = scmp.eq.s32.totalorder %s8, 0
    %p96 = por %p94, %p95
    %p97 = scmp.ne.s32.totalorder %s86, %s89
    %p98 = scmp.eq.s32.totalorder %s13, 1
    %p99 = por %p97, %p98
    %p100 = scmp.ne.s32.totalorder %s89, %s90
    %p101 = scmp.eq.s32.totalorder %s13, 0
    %p102 = por %p100, %p101
    %p103 = scmp.ne.s32.totalorder %s89, %s90
    %p104 = scmp.eq.s32.totalorder %s14, 1
    %p105 = por %p103, %p104
    %p107 = scmp.ne.s32.totalorder %s90, %s106
    %p108 = scmp.eq.s32.totalorder %s14, 0
    %p109 = por %p107, %p108
    %p110 = scmp.le.s32.totalorder 1, %s8
    %p111 = scmp.lt.s32.totalorder %s8, 3
    %p112 = pnand %p110, %p111
    %p113 = pneg %p112
    // Predicated region
    $region9: #{simple_block2d_forward.8} parent=5 // pred_check
      _
    $region10: #{simple_block2d_forward.8} parent=5 // pred_check_branch
      %115 = sbr.rel (%p112) target = $region12
    $region11: #{simple_block2d_forward.8} parent=5 // pred_region
      %s116 = ssub.s32 %s8, 1
    $region12: #{simple_block2d_forward.8} parent=5 // pred_fallthru
      _
    %p117 = scmp.lt.s32.totalorder %s8, 2
    // Predicated region
    $region13: #{simple_block2d_forward.8} parent=5 // pred_check
      %p118 = pneg %p117
    $region14: #{simple_block2d_forward.8} parent=5 // pred_check_branch
      %120 = sbr.rel (%p118) target = $region16
    $region15: #{simple_block2d_forward.8} parent=5 // pred_region
      // Predicated region
      $region17: #{simple_block2d_forward.8} parent=15 // pred_check
        %p121 = pneg %p42
      $region18: #{simple_block2d_forward.8} parent=15 // pred_check_branch
        %123 = sbr.rel (%p121) target = $region20
      $region19: #{simple_block2d_forward.8} parent=15 // pred_region
        %s124 = smul.u32 16, %s15
        %p125 = scmp.lt.s32.totalorder %s124, 31
        %s126 = scalar_select %p125, %s124, 31
        %p127 = scmp.lt.s32.totalorder %s16, 0
        %s128 = scalar_select %p127, %s16, 0
        %s129 = sadd.s32 %s128, %s126
        %s130 = smul.addr %s129, 2
        %s131 = scalar_lea.vmem %s0, %s130
        %s132 = smul.u32 16, %s15
      $region20: #{simple_block2d_forward.8} parent=15 // pred_fallthru
        _
      // Predicated region
      $region21: #{simple_block2d_forward.8} parent=15 // pred_check
        %p133 = pneg %p68
      $region22: #{simple_block2d_forward.8} parent=15 // pred_check_branch
        %135 = sbr.rel (%p133) target = $region24
      $region23: #{simple_block2d_forward.8} parent=15 // pred_region
        %s136 = smul.u32 16, %s15
        %p137 = scmp.lt.s32.totalorder %s136, 31
        %s138 = scalar_select %p137, %s136, 31
        %s139 = smul.addr %s138, 5
        %s140 = smul.addr %s139, 8
        %s141 = scalar_lea.vmem %s1, %s140
        %s142 = smul.u32 16, %s15
      $region24: #{simple_block2d_forward.8} parent=15 // pred_fallthru
        _
    $region16: #{simple_block2d_forward.8} parent=5 // pred_fallthru
      _
    %p143 = scmp.le.s32.totalorder 1, %s8
    %p144 = scmp.lt.s32.totalorder %s8, 3
    %p145 = pnand %p143, %p144
    %p146 = pneg %p145
    // Predicated region
    $region25: #{simple_block2d_forward.8} parent=5 // pred_check
      _
    $region26: #{simple_block2d_forward.8} parent=5 // pred_check_branch
      %148 = sbr.rel (%p145) target = $region28
    $region27: #{simple_block2d_forward.8} parent=5 // pred_region
      %s149 = ssub.s32 %s8, 1
      %s150 = smul.u32 16, %s17
      %p151 = scmp.lt.s32.totalorder %s150, 31
      %s152 = scalar_select %p151, %s150, 31
      %p153 = scmp.lt.s32.totalorder %s18, 0
      %s154 = scalar_select %p153, %s18, 0
      %s155 = sadd.s32 %s154, %s152
      %s156 = smul.addr %s155, 2
      %s157 = scalar_lea.vmem %s0, %s156
      %p158 = pneg %p48
      %p159 = pneg %p45
      %s160 = smul.u32 16, %s17
      %p161 = scmp.lt.s32.totalorder %s160, 31
      %s162 = scalar_select %p161, %s160, 31
      %s163 = smul.addr %s162, 5
      %s164 = smul.addr %s163, 8
      %s165 = scalar_lea.vmem %s1, %s164
      %p166 = pneg %p74
      %p167 = pneg %p71
      %p168 = pneg %p102
      %p169 = pneg %p99
      %s170 = smul.u32 16, %s17
      %p171 = scmp.lt.s32.totalorder %s170, 31
      %s172 = scalar_select %p171, %s170, 31
      %p173 = scmp.lt.s32.totalorder %s18, 0
      %s174 = scalar_select %p173, %s18, 0
      %s175 = sadd.s32 %s174, %s172
      %s176 = smul.addr %s175, 2
      %s177 = scalar_lea.vmem %s2, %s176
      %s178 = smul.u32 16, %s17
      %p179 = scmp.lt.s32.totalorder %s178, 31
      %s180 = scalar_select %p179, %s178, 31
      %p181 = scmp.lt.s32.totalorder %s18, 0
      %s182 = scalar_select %p181, %s18, 0
      %s183 = sadd.s32 %s182, %s180
      %s184 = smul.addr %s183, 2
      %s185 = scalar_lea.vmem %s0, %s184
      %s186 = smul.u32 16, %s17
      %s187 = smul.u32 16, %s17
      %p188 = scmp.lt.s32.totalorder %s187, 31
      %s189 = scalar_select %p188, %s187, 31
      %s190 = smul.addr %s189, 5
      %s191 = smul.addr %s190, 8
      %s192 = scalar_lea.vmem %s1, %s191
      %s193 = smul.u32 16, %s17
      %s194 = smul.u32 16, %s17
      %p195 = scmp.lt.s32.totalorder %s194, 31
      %s196 = scalar_select %p195, %s194, 31
      %p197 = scmp.lt.s32.totalorder %s18, 0
      %s198 = scalar_select %p197, %s18, 0
      %s199 = sadd.s32 %s198, %s196
      %s200 = smul.addr %s199, 2
      %s201 = scalar_lea.vmem %s2, %s200
      %s202 = smul.u32 16, %s17
      %v203 = vld [vmem:[%s185] sm:$0x3]
      %v204 = vld [vmem:[%s185 + $0x2] sm:$0x3]
      %v205 = vld [vmem:[%s185 + $0x4] sm:$0x3]
      %v206 = vld [vmem:[%s185 + $0x6] sm:$0x3]
      %v207 = vld [vmem:[%s185 + $0x8] sm:$0x3]
      %v208 = vld [vmem:[%s185 + $0xa] sm:$0x3]
      %v209 = vld [vmem:[%s185 + $0xc] sm:$0x3]
      %v210 = vld [vmem:[%s185 + $0xe] sm:$0x3]
      %v211 = vld [vmem:[%s185 + $0x10] sm:$0x3]
      %v212 = vld [vmem:[%s185 + $0x12] sm:$0x3]
      %v213 = vld [vmem:[%s185 + $0x14] sm:$0x3]
      %v214 = vld [vmem:[%s185 + $0x16] sm:$0x3]
      %v215 = vld [vmem:[%s185 + $0x18] sm:$0x3]
      %v216 = vld [vmem:[%s185 + $0x1a] sm:$0x3]
      %v217 = vld [vmem:[%s185 + $0x1c] sm:$0x3]
      %v218 = vld [vmem:[%s185 + $0x1e] sm:$0x3]
      %v219 = vld [vmem:[%s192] sm:$0xff]
      %v220 = vld [vmem:[%s192 + $0x8] sm:$0xff]
      %v221 = vld [vmem:[%s192 + $0x10] sm:$0xff]
      %v222 = vld [vmem:[%s192 + $0x18] sm:$0xff]
      %v223 = vld [vmem:[%s192 + $0x20] sm:$0xff]
      %v224 = vld [vmem:[%s192 + $0x28] sm:$0xff]
      %v225 = vld [vmem:[%s192 + $0x30] sm:$0xff]
      %v226 = vld [vmem:[%s192 + $0x38] sm:$0xff]
      %v227 = vld [vmem:[%s192 + $0x40] sm:$0xff]
      %v228 = vld [vmem:[%s192 + $0x48] sm:$0xff]
      %v229 = vld [vmem:[%s192 + $0x50] sm:$0xff]
      %v230 = vld [vmem:[%s192 + $0x58] sm:$0xff]
      %v231 = vld [vmem:[%s192 + $0x60] sm:$0xff]
      %v232 = vld [vmem:[%s192 + $0x68] sm:$0xff]
      %v233 = vld [vmem:[%s192 + $0x70] sm:$0xff]
      %v234 = vld [vmem:[%s192 + $0x78] sm:$0xff]
      %v235 = vld [vmem:[%s192 + $0x80] sm:$0xff]
      %v236 = vld [vmem:[%s192 + $0x88] sm:$0xff]
      %v237 = vld [vmem:[%s192 + $0x90] sm:$0xff]
      %v238 = vld [vmem:[%s192 + $0x98] sm:$0xff]
      %v239 = vld [vmem:[%s192 + $0xa0] sm:$0xff]
      %v240 = vld [vmem:[%s192 + $0xa8] sm:$0xff]
      %v241 = vld [vmem:[%s192 + $0xb0] sm:$0xff]
      %v242 = vld [vmem:[%s192 + $0xb8] sm:$0xff]
      %v243 = vld [vmem:[%s192 + $0xc0] sm:$0xff]
      %v244 = vld [vmem:[%s192 + $0xc8] sm:$0xff]
      %v245 = vld [vmem:[%s192 + $0xd0] sm:$0xff]
      %v246 = vld [vmem:[%s192 + $0xd8] sm:$0xff]
      %v247 = vld [vmem:[%s192 + $0xe0] sm:$0xff]
      %v248 = vld [vmem:[%s192 + $0xe8] sm:$0xff]
      %v249 = vld [vmem:[%s192 + $0xf0] sm:$0xff]
      %v250 = vld [vmem:[%s192 + $0xf8] sm:$0xff]
      %v251 = vld [vmem:[%s192 + $0x100] sm:$0xff]
      %v252 = vld [vmem:[%s192 + $0x108] sm:$0xff]
      %v253 = vld [vmem:[%s192 + $0x110] sm:$0xff]
      %v254 = vld [vmem:[%s192 + $0x118] sm:$0xff]
      %v255 = vld [vmem:[%s192 + $0x120] sm:$0xff]
      %v256 = vld [vmem:[%s192 + $0x128] sm:$0xff]
      %v257 = vld [vmem:[%s192 + $0x130] sm:$0xff]
      %v258 = vld [vmem:[%s192 + $0x138] sm:$0xff]
      %v259 = vld [vmem:[%s192 + $0x140] sm:$0xff]
      %v260 = vld [vmem:[%s192 + $0x148] sm:$0xff]
      %v261 = vld [vmem:[%s192 + $0x150] sm:$0xff]
      %v262 = vld [vmem:[%s192 + $0x158] sm:$0xff]
      %v263 = vld [vmem:[%s192 + $0x160] sm:$0xff]
      %v264 = vld [vmem:[%s192 + $0x168] sm:$0xff]
      %v265 = vld [vmem:[%s192 + $0x170] sm:$0xff]
      %v266 = vld [vmem:[%s192 + $0x178] sm:$0xff]
      %v267 = vld [vmem:[%s192 + $0x180] sm:$0xff]
      %v268 = vld [vmem:[%s192 + $0x188] sm:$0xff]
      %v269 = vld [vmem:[%s192 + $0x190] sm:$0xff]
      %v270 = vld [vmem:[%s192 + $0x198] sm:$0xff]
      %v271 = vld [vmem:[%s192 + $0x1a0] sm:$0xff]
      %v272 = vld [vmem:[%s192 + $0x1a8] sm:$0xff]
      %v273 = vld [vmem:[%s192 + $0x1b0] sm:$0xff]
      %v274 = vld [vmem:[%s192 + $0x1b8] sm:$0xff]
      %v275 = vld [vmem:[%s192 + $0x1c0] sm:$0xff]
      %v276 = vld [vmem:[%s192 + $0x1c8] sm:$0xff]
      %v277 = vld [vmem:[%s192 + $0x1d0] sm:$0xff]
      %v278 = vld [vmem:[%s192 + $0x1d8] sm:$0xff]
      %v279 = vld [vmem:[%s192 + $0x1e0] sm:$0xff]
      %v280 = vld [vmem:[%s192 + $0x1e8] sm:$0xff]
      %v281 = vld [vmem:[%s192 + $0x1f0] sm:$0xff]
      %v282 = vld [vmem:[%s192 + $0x1f8] sm:$0xff]
      %v283 = vld [vmem:[%s192 + $0x200] sm:$0xff]
      %v284 = vld [vmem:[%s192 + $0x208] sm:$0xff]
      %v285 = vld [vmem:[%s192 + $0x210] sm:$0xff]
      %v286 = vld [vmem:[%s192 + $0x218] sm:$0xff]
      %v287 = vld [vmem:[%s192 + $0x220] sm:$0xff]
      %v288 = vld [vmem:[%s192 + $0x228] sm:$0xff]
      %v289 = vld [vmem:[%s192 + $0x230] sm:$0xff]
      %v290 = vld [vmem:[%s192 + $0x238] sm:$0xff]
      %v291 = vld [vmem:[%s192 + $0x240] sm:$0xff]
      %v292 = vld [vmem:[%s192 + $0x248] sm:$0xff]
      %v293 = vld [vmem:[%s192 + $0x250] sm:$0xff]
      %v294 = vld [vmem:[%s192 + $0x258] sm:$0xff]
      %v295 = vld [vmem:[%s192 + $0x260] sm:$0xff]
      %v296 = vld [vmem:[%s192 + $0x268] sm:$0xff]
      %v297 = vld [vmem:[%s192 + $0x270] sm:$0xff]
      %v298 = vld [vmem:[%s192 + $0x278] sm:$0xff]
      %vm299 = vcmask 326656
      %v301 = vsel %vm299, %v203, 0
      %303 = vmatprep.subr.mxu0 0.0
      %304 = vmatpush1.msra.mxu0 %v219
      %305 = vmatprep.subr.mxu0 0.0
      %306 = vmatpush1.msra.mxu0 %v220
      %307 = vmatprep.subr.mxu0 0.0
      %308 = vmatpush1.msra.mxu0 %v221
      %309 = vmatprep.subr.mxu0 0.0
      %310 = vmatpush1.msra.mxu0 %v222
      %311 = vmatprep.subr.mxu0 0.0
      %312 = vmatpush1.msra.mxu0 %v223
      %313 = vmatprep.subr.mxu0 0.0
      %314 = vmatpush1.msra.mxu0 0.0
      %315 = vmatprep.subr.mxu0 0.0
      %316 = vmatpush1.msra.mxu0 0.0
      %317 = vmatprep.subr.mxu0 0.0
      %318 = vmatpush1.msra.mxu0 0.0
      %319 = vmatprep.subr.mxu0 0.0
      %320 = vmatpush1.msra.mxu0 0.0
      %321 = vmatprep.subr.mxu0 0.0
      %322 = vmatpush1.msra.mxu0 0.0
      %323 = vmatprep.subr.mxu0 0.0
      %324 = vmatpush1.msra.mxu0 0.0
      %325 = vmatprep.subr.mxu0 0.0
      %326 = vmatpush1.msra.mxu0 0.0
      %327 = vmatprep.subr.mxu0 0.0
      %328 = vmatpush1.msra.mxu0 0.0
      %329 = vmatprep.subr.mxu0 0.0
      %330 = vmatpush1.msra.mxu0 0.0
      %331 = vmatprep.subr.mxu0 0.0
      %332 = vmatpush1.msra.mxu0 0.0
      %333 = vmatprep.subr.mxu0 0.0
      %334 = vmatpush1.msra.mxu0 0.0
      %335 = vmatprep.subr.mxu0 0.0
      %336 = vmatpush1.msra.mxu0 0.0
      %337 = vmatprep.subr.mxu0 0.0
      %338 = vmatpush1.msra.mxu0 0.0
      %339 = vmatprep.subr.mxu0 0.0
      %340 = vmatpush1.msra.mxu0 0.0
      %341 = vmatprep.subr.mxu0 0.0
      %342 = vmatpush1.msra.mxu0 0.0
      %343 = vmatprep.subr.mxu0 0.0
      %344 = vmatpush1.msra.mxu0 0.0
      %345 = vmatprep.subr.mxu0 0.0
      %346 = vmatpush1.msra.mxu0 0.0
      %347 = vmatprep.subr.mxu0 0.0
      %348 = vmatpush1.msra.mxu0 0.0
      %349 = vmatprep.subr.mxu0 0.0
      %350 = vmatpush1.msra.mxu0 0.0
      %351 = vmatprep.subr.mxu0 0.0
      %352 = vmatpush1.msra.mxu0 0.0
      %353 = vmatprep.subr.mxu0 0.0
      %354 = vmatpush1.msra.mxu0 0.0
      %355 = vmatprep.subr.mxu0 0.0
      %356 = vmatpush1.msra.mxu0 0.0
      %357 = vmatprep.subr.mxu0 0.0
      %358 = vmatpush1.msra.mxu0 0.0
      %359 = vmatprep.subr.mxu0 0.0
      %360 = vmatpush1.msra.mxu0 0.0
      %361 = vmatprep.subr.mxu0 0.0
      %362 = vmatpush1.msra.mxu0 0.0
      %363 = vmatprep.subr.mxu0 0.0
      %364 = vmatpush1.msra.mxu0 0.0
      %365 = vmatprep.subr.mxu0 0.0
      %366 = vmatpush1.msra.mxu0 0.0
      %367 = vmatprep.mubr.f32.mxu0 0.0
      %368 = vmatmul.mubr.f32.gmra.mrb[0].mxu0 %v301
      %v369 = vpop.f32.mrb[0].mxu0
      %v370 = vadd.f32 0.0, %v369
      %v371 = vpop.f32.mrb[0].mxu0
      %372 = vdwg.mxu0
      %v374 = vsel %vm299, %v204, 0
      %376 = vmatprep.subr.mxu0 0.0
      %377 = vmatpush1.msra.mxu0 %v224
      %378 = vmatprep.subr.mxu0 0.0
      %379 = vmatpush1.msra.mxu0 %v225
      %380 = vmatprep.subr.mxu0 0.0
      %381 = vmatpush1.msra.mxu0 %v226
      %382 = vmatprep.subr.mxu0 0.0
      %383 = vmatpush1.msra.mxu0 %v227
      %384 = vmatprep.subr.mxu0 0.0
      %385 = vmatpush1.msra.mxu0 %v228
      %386 = vmatprep.subr.mxu0 0.0
      %387 = vmatpush1.msra.mxu0 0.0
      %388 = vmatprep.subr.mxu0 0.0
      %389 = vmatpush1.msra.mxu0 0.0
      %390 = vmatprep.subr.mxu0 0.0
      %391 = vmatpush1.msra.mxu0 0.0
      %392 = vmatprep.subr.mxu0 0.0
      %393 = vmatpush1.msra.mxu0 0.0
      %394 = vmatprep.subr.mxu0 0.0
      %395 = vmatpush1.msra.mxu0 0.0
      %396 = vmatprep.subr.mxu0 0.0
      %397 = vmatpush1.msra.mxu0 0.0
      %398 = vmatprep.subr.mxu0 0.0
      %399 = vmatpush1.msra.mxu0 0.0
      %400 = vmatprep.subr.mxu0 0.0
      %401 = vmatpush1.msra.mxu0 0.0
      %402 = vmatprep.subr.mxu0 0.0
      %403 = vmatpush1.msra.mxu0 0.0
      %404 = vmatprep.subr.mxu0 0.0
      %405 = vmatpush1.msra.mxu0 0.0
      %406 = vmatprep.subr.mxu0 0.0
      %407 = vmatpush1.msra.mxu0 0.0
      %408 = vmatprep.subr.mxu0 0.0
      %409 = vmatpush1.msra.mxu0 0.0
      %410 = vmatprep.subr.mxu0 0.0
      %411 = vmatpush1.msra.mxu0 0.0
      %412 = vmatprep.subr.mxu0 0.0
      %413 = vmatpush1.msra.mxu0 0.0
      %414 = vmatprep.subr.mxu0 0.0
      %415 = vmatpush1.msra.mxu0 0.0
      %416 = vmatprep.subr.mxu0 0.0
      %417 = vmatpush1.msra.mxu0 0.0
      %418 = vmatprep.subr.mxu0 0.0
      %419 = vmatpush1.msra.mxu0 0.0
      %420 = vmatprep.subr.mxu0 0.0
      %421 = vmatpush1.msra.mxu0 0.0
      %422 = vmatprep.subr.mxu0 0.0
      %423 = vmatpush1.msra.mxu0 0.0
      %424 = vmatprep.subr.mxu0 0.0
      %425 = vmatpush1.msra.mxu0 0.0
      %426 = vmatprep.subr.mxu0 0.0
      %427 = vmatpush1.msra.mxu0 0.0
      %428 = vmatprep.subr.mxu0 0.0
      %429 = vmatpush1.msra.mxu0 0.0
      %430 = vmatprep.subr.mxu0 0.0
      %431 = vmatpush1.msra.mxu0 0.0
      %432 = vmatprep.subr.mxu0 0.0
      %433 = vmatpush1.msra.mxu0 0.0
      %434 = vmatprep.subr.mxu0 0.0
      %435 = vmatpush1.msra.mxu0 0.0
      %436 = vmatprep.subr.mxu0 0.0
      %437 = vmatpush1.msra.mxu0 0.0
      %438 = vmatprep.subr.mxu0 0.0
      %439 = vmatpush1.msra.mxu0 0.0
      %440 = vmatprep.mubr.f32.mxu0 0.0
      %441 = vmatmul.mubr.f32.gmra.mrb[0].mxu0 %v374
      %v442 = vpop.f32.mrb[0].mxu0
      %v443 = vadd.f32 0.0, %v442
      %v444 = vpop.f32.mrb[0].mxu0
      %445 = vdwg.mxu0
      %v447 = vsel %vm299, %v205, 0
      %449 = vmatprep.subr.mxu0 0.0
      %450 = vmatpush1.msra.mxu0 %v229
      %451 = vmatprep.subr.mxu0 0.0
      %452 = vmatpush1.msra.mxu0 %v230
      %453 = vmatprep.subr.mxu0 0.0
      %454 = vmatpush1.msra.mxu0 %v231
      %455 = vmatprep.subr.mxu0 0.0
      %456 = vmatpush1.msra.mxu0 %v232
      %457 = vmatprep.subr.mxu0 0.0
      %458 = vmatpush1.msra.mxu0 %v233
      %459 = vmatprep.subr.mxu0 0.0
      %460 = vmatpush1.msra.mxu0 0.0
      %461 = vmatprep.subr.mxu0 0.0
      %462 = vmatpush1.msra.mxu0 0.0
      %463 = vmatprep.subr.mxu0 0.0
      %464 = vmatpush1.msra.mxu0 0.0
      %465 = vmatprep.subr.mxu0 0.0
      %466 = vmatpush1.msra.mxu0 0.0
      %467 = vmatprep.subr.mxu0 0.0
      %468 = vmatpush1.msra.mxu0 0.0
      %469 = vmatprep.subr.mxu0 0.0
      %470 = vmatpush1.msra.mxu0 0.0
      %471 = vmatprep.subr.mxu0 0.0
      %472 = vmatpush1.msra.mxu0 0.0
      %473 = vmatprep.subr.mxu0 0.0
      %474 = vmatpush1.msra.mxu0 0.0
      %475 = vmatprep.subr.mxu0 0.0
      %476 = vmatpush1.msra.mxu0 0.0
      %477 = vmatprep.subr.mxu0 0.0
      %478 = vmatpush1.msra.mxu0 0.0
      %479 = vmatprep.subr.mxu0 0.0
      %480 = vmatpush1.msra.mxu0 0.0
      %481 = vmatprep.subr.mxu0 0.0
      %482 = vmatpush1.msra.mxu0 0.0
      %483 = vmatprep.subr.mxu0 0.0
      %484 = vmatpush1.msra.mxu0 0.0
      %485 = vmatprep.subr.mxu0 0.0
      %486 = vmatpush1.msra.mxu0 0.0
      %487 = vmatprep.subr.mxu0 0.0
      %488 = vmatpush1.msra.mxu0 0.0
      %489 = vmatprep.subr.mxu0 0.0
      %490 = vmatpush1.msra.mxu0 0.0
      %491 = vmatprep.subr.mxu0 0.0
      %492 = vmatpush1.msra.mxu0 0.0
      %493 = vmatprep.subr.mxu0 0.0
      %494 = vmatpush1.msra.mxu0 0.0
      %495 = vmatprep.subr.mxu0 0.0
      %496 = vmatpush1.msra.mxu0 0.0
      %497 = vmatprep.subr.mxu0 0.0
      %498 = vmatpush1.msra.mxu0 0.0
      %499 = vmatprep.subr.mxu0 0.0
      %500 = vmatpush1.msra.mxu0 0.0
      %501 = vmatprep.subr.mxu0 0.0
      %502 = vmatpush1.msra.mxu0 0.0
      %503 = vmatprep.subr.mxu0 0.0
      %504 = vmatpush1.msra.mxu0 0.0
      %505 = vmatprep.subr.mxu0 0.0
      %506 = vmatpush1.msra.mxu0 0.0
      %507 = vmatprep.subr.mxu0 0.0
      %508 = vmatpush1.msra.mxu0 0.0
      %509 = vmatprep.subr.mxu0 0.0
      %510 = vmatpush1.msra.mxu0 0.0
      %511 = vmatprep.subr.mxu0 0.0
      %512 = vmatpush1.msra.mxu0 0.0
      %513 = vmatprep.mubr.f32.mxu0 0.0
      %514 = vmatmul.mubr.f32.gmra.mrb[0].mxu0 %v447
      %v515 = vpop.f32.mrb[0].mxu0
      %v516 = vadd.f32 0.0, %v515
      %v517 = vpop.f32.mrb[0].mxu0
      %518 = vdwg.mxu0
      %v520 = vsel %vm299, %v206, 0
      %522 = vmatprep.subr.mxu0 0.0
      %523 = vmatpush1.msra.mxu0 %v234
      %524 = vmatprep.subr.mxu0 0.0
      %525 = vmatpush1.msra.mxu0 %v235
      %526 = vmatprep.subr.mxu0 0.0
      %527 = vmatpush1.msra.mxu0 %v236
      %528 = vmatprep.subr.mxu0 0.0
      %529 = vmatpush1.msra.mxu0 %v237
      %530 = vmatprep.subr.mxu0 0.0
      %531 = vmatpush1.msra.mxu0 %v238
      %532 = vmatprep.subr.mxu0 0.0
      %533 = vmatpush1.msra.mxu0 0.0
      %534 = vmatprep.subr.mxu0 0.0
      %535 = vmatpush1.msra.mxu0 0.0
      %536 = vmatprep.subr.mxu0 0.0
      %537 = vmatpush1.msra.mxu0 0.0
      %538 = vmatprep.subr.mxu0 0.0
      %539 = vmatpush1.msra.mxu0 0.0
      %540 = vmatprep.subr.mxu0 0.0
      %541 = vmatpush1.msra.mxu0 0.0
      %542 = vmatprep.subr.mxu0 0.0
      %543 = vmatpush1.msra.mxu0 0.0
      %544 = vmatprep.subr.mxu0 0.0
      %545 = vmatpush1.msra.mxu0 0.0
      %546 = vmatprep.subr.mxu0 0.0
      %547 = vmatpush1.msra.mxu0 0.0
      %548 = vmatprep.subr.mxu0 0.0
      %549 = vmatpush1.msra.mxu0 0.0
      %550 = vmatprep.subr.mxu0 0.0
      %551 = vmatpush1.msra.mxu0 0.0
      %552 = vmatprep.subr.mxu0 0.0
      %553 = vmatpush1.msra.mxu0 0.0
      %554 = vmatprep.subr.mxu0 0.0
      %555 = vmatpush1.msra.mxu0 0.0
      %556 = vmatprep.subr.mxu0 0.0
      %557 = vmatpush1.msra.mxu0 0.0
      %558 = vmatprep.subr.mxu0 0.0
      %559 = vmatpush1.msra.mxu0 0.0
      %560 = vmatprep.subr.mxu0 0.0
      %561 = vmatpush1.msra.mxu0 0.0
      %562 = vmatprep.subr.mxu0 0.0
      %563 = vmatpush1.msra.mxu0 0.0
      %564 = vmatprep.subr.mxu0 0.0
      %565 = vmatpush1.msra.mxu0 0.0
      %566 = vmatprep.subr.mxu0 0.0
      %567 = vmatpush1.msra.mxu0 0.0
      %568 = vmatprep.subr.mxu0 0.0
      %569 = vmatpush1.msra.mxu0 0.0
      %570 = vmatprep.subr.mxu0 0.0
      %571 = vmatpush1.msra.mxu0 0.0
      %572 = vmatprep.subr.mxu0 0.0
      %573 = vmatpush1.msra.mxu0 0.0
      %574 = vmatprep.subr.mxu0 0.0
      %575 = vmatpush1.msra.mxu0 0.0
      %576 = vmatprep.subr.mxu0 0.0
      %577 = vmatpush1.msra.mxu0 0.0
      %578 = vmatprep.subr.mxu0 0.0
      %579 = vmatpush1.msra.mxu0 0.0
      %580 = vmatprep.subr.mxu0 0.0
      %581 = vmatpush1.msra.mxu0 0.0
      %582 = vmatprep.subr.mxu0 0.0
      %583 = vmatpush1.msra.mxu0 0.0
      %584 = vmatprep.subr.mxu0 0.0
      %585 = vmatpush1.msra.mxu0 0.0
      %586 = vmatprep.mubr.f32.mxu0 0.0
      %587 = vmatmul.mubr.f32.gmra.mrb[0].mxu0 %v520
      %v588 = vpop.f32.mrb[0].mxu0
      %v589 = vadd.f32 0.0, %v588
      %v590 = vpop.f32.mrb[0].mxu0
      %591 = vdwg.mxu0
      %v593 = vsel %vm299, %v207, 0
      %595 = vmatprep.subr.mxu0 0.0
      %596 = vmatpush1.msra.mxu0 %v239
      %597 = vmatprep.subr.mxu0 0.0
      %598 = vmatpush1.msra.mxu0 %v240
      %599 = vmatprep.subr.mxu0 0.0
      %600 = vmatpush1.msra.mxu0 %v241
      %601 = vmatprep.subr.mxu0 0.0
      %602 = vmatpush1.msra.mxu0 %v242
      %603 = vmatprep.subr.mxu0 0.0
      %604 = vmatpush1.msra.mxu0 %v243
      %605 = vmatprep.subr.mxu0 0.0
      %606 = vmatpush1.msra.mxu0 0.0
      %607 = vmatprep.subr.mxu0 0.0
      %608 = vmatpush1.msra.mxu0 0.0
      %609 = vmatprep.subr.mxu0 0.0
      %610 = vmatpush1.msra.mxu0 0.0
      %611 = vmatprep.subr.mxu0 0.0
      %612 = vmatpush1.msra.mxu0 0.0
      %613 = vmatprep.subr.mxu0 0.0
      %614 = vmatpush1.msra.mxu0 0.0
      %615 = vmatprep.subr.mxu0 0.0
      %616 = vmatpush1.msra.mxu0 0.0
      %617 = vmatprep.subr.mxu0 0.0
      %618 = vmatpush1.msra.mxu0 0.0
      %619 = vmatprep.subr.mxu0 0.0
      %620 = vmatpush1.msra.mxu0 0.0
      %621 = vmatprep.subr.mxu0 0.0
      %622 = vmatpush1.msra.mxu0 0.0
      %623 = vmatprep.subr.mxu0 0.0
      %624 = vmatpush1.msra.mxu0 0.0
      %625 = vmatprep.subr.mxu0 0.0
      %626 = vmatpush1.msra.mxu0 0.0
      %627 = vmatprep.subr.mxu0 0.0
      %628 = vmatpush1.msra.mxu0 0.0
      %629 = vmatprep.subr.mxu0 0.0
      %630 = vmatpush1.msra.mxu0 0.0
      %631 = vmatprep.subr.mxu0 0.0
      %632 = vmatpush1.msra.mxu0 0.0
      %633 = vmatprep.subr.mxu0 0.0
      %634 = vmatpush1.msra.mxu0 0.0
      %635 = vmatprep.subr.mxu0 0.0
      %636 = vmatpush1.msra.mxu0 0.0
      %637 = vmatprep.subr.mxu0 0.0
      %638 = vmatpush1.msra.mxu0 0.0
      %639 = vmatprep.subr.mxu0 0.0
      %640 = vmatpush1.msra.mxu0 0.0
      %641 = vmatprep.subr.mxu0 0.0
      %642 = vmatpush1.msra.mxu0 0.0
      %643 = vmatprep.subr.mxu0 0.0
      %644 = vmatpush1.msra.mxu0 0.0
      %645 = vmatprep.subr.mxu0 0.0
      %646 = vmatpush1.msra.mxu0 0.0
      %647 = vmatprep.subr.mxu0 0.0
      %648 = vmatpush1.msra.mxu0 0.0
      %649 = vmatprep.subr.mxu0 0.0
      %650 = vmatpush1.msra.mxu0 0.0
      %651 = vmatprep.subr.mxu0 0.0
      %652 = vmatpush1.msra.mxu0 0.0
      %653 = vmatprep.subr.mxu0 0.0
      %654 = vmatpush1.msra.mxu0 0.0
      %655 = vmatprep.subr.mxu0 0.0
      %656 = vmatpush1.msra.mxu0 0.0
      %657 = vmatprep.subr.mxu0 0.0
      %658 = vmatpush1.msra.mxu0 0.0
      %659 = vmatprep.mubr.f32.mxu0 0.0
      %660 = vmatmul.mubr.f32.gmra.mrb[0].mxu0 %v593
      %v661 = vpop.f32.mrb[0].mxu0
      %v662 = vadd.f32 0.0, %v661
      %v663 = vpop.f32.mrb[0].mxu0
      %664 = vdwg.mxu0
      %v666 = vsel %vm299, %v208, 0
      %668 = vmatprep.subr.mxu0 0.0
      %669 = vmatpush1.msra.mxu0 %v244
      %670 = vmatprep.subr.mxu0 0.0
      %671 = vmatpush1.msra.mxu0 %v245
      %672 = vmatprep.subr.mxu0 0.0
      %673 = vmatpush1.msra.mxu0 %v246
      %674 = vmatprep.subr.mxu0 0.0
      %675 = vmatpush1.msra.mxu0 %v247
      %676 = vmatprep.subr.mxu0 0.0
      %677 = vmatpush1.msra.mxu0 %v248
      %678 = vmatprep.subr.mxu0 0.0
      %679 = vmatpush1.msra.mxu0 0.0
      %680 = vmatprep.subr.mxu0 0.0
      %681 = vmatpush1.msra.mxu0 0.0
      %682 = vmatprep.subr.mxu0 0.0
      %683 = vmatpush1.msra.mxu0 0.0
      %684 = vmatprep.subr.mxu0 0.0
      %685 = vmatpush1.msra.mxu0 0.0
      %686 = vmatprep.subr.mxu0 0.0
      %687 = vmatpush1.msra.mxu0 0.0
      %688 = vmatprep.subr.mxu0 0.0
      %689 = vmatpush1.msra.mxu0 0.0
      %690 = vmatprep.subr.mxu0 0.0
      %691 = vmatpush1.msra.mxu0 0.0
      %692 = vmatprep.subr.mxu0 0.0
      %693 = vmatpush1.msra.mxu0 0.0
      %694 = vmatprep.subr.mxu0 0.0
      %695 = vmatpush1.msra.mxu0 0.0
      %696 = vmatprep.subr.mxu0 0.0
      %697 = vmatpush1.msra.mxu0 0.0
      %698 = vmatprep.subr.mxu0 0.0
      %699 = vmatpush1.msra.mxu0 0.0
      %700 = vmatprep.subr.mxu0 0.0
      %701 = vmatpush1.msra.mxu0 0.0
      %702 = vmatprep.subr.mxu0 0.0
      %703 = vmatpush1.msra.mxu0 0.0
      %704 = vmatprep.subr.mxu0 0.0
      %705 = vmatpush1.msra.mxu0 0.0
      %706 = vmatprep.subr.mxu0 0.0
      %707 = vmatpush1.msra.mxu0 0.0
      %708 = vmatprep.subr.mxu0 0.0
      %709 = vmatpush1.msra.mxu0 0.0
      %710 = vmatprep.subr.mxu0 0.0
      %711 = vmatpush1.msra.mxu0 0.0
      %712 = vmatprep.subr.mxu0 0.0
      %713 = vmatpush1.msra.mxu0 0.0
      %714 = vmatprep.subr.mxu0 0.0
      %715 = vmatpush1.msra.mxu0 0.0
      %716 = vmatprep.subr.mxu0 0.0
      %717 = vmatpush1.msra.mxu0 0.0
      %718 = vmatprep.subr.mxu0 0.0
      %719 = vmatpush1.msra.mxu0 0.0
      %720 = vmatprep.subr.mxu0 0.0
      %721 = vmatpush1.msra.mxu0 0.0
      %722 = vmatprep.subr.mxu0 0.0
      %723 = vmatpush1.msra.mxu0 0.0
      %724 = vmatprep.subr.mxu0 0.0
      %725 = vmatpush1.msra.mxu0 0.0
      %726 = vmatprep.subr.mxu0 0.0
      %727 = vmatpush1.msra.mxu0 0.0
      %728 = vmatprep.subr.mxu0 0.0
      %729 = vmatpush1.msra.mxu0 0.0
      %730 = vmatprep.subr.mxu0 0.0
      %731 = vmatpush1.msra.mxu0 0.0
      %732 = vmatprep.mubr.f32.mxu0 0.0
      %733 = vmatmul.mubr.f32.gmra.mrb[0].mxu0 %v666
      %v734 = vpop.f32.mrb[0].mxu0
      %v735 = vadd.f32 0.0, %v734
      %v736 = vpop.f32.mrb[0].mxu0
      %737 = vdwg.mxu0
      %v739 = vsel %vm299, %v209, 0
      %741 = vmatprep.subr.mxu0 0.0
      %742 = vmatpush1.msra.mxu0 %v249
      %743 = vmatprep.subr.mxu0 0.0
      %744 = vmatpush1.msra.mxu0 %v250
      %745 = vmatprep.subr.mxu0 0.0
      %746 = vmatpush1.msra.mxu0 %v251
      %747 = vmatprep.subr.mxu0 0.0
      %748 = vmatpush1.msra.mxu0 %v252
      %749 = vmatprep.subr.mxu0 0.0
      %750 = vmatpush1.msra.mxu0 %v253
      %751 = vmatprep.subr.mxu0 0.0
      %752 = vmatpush1.msra.mxu0 0.0
      %753 = vmatprep.subr.mxu0 0.0
      %754 = vmatpush1.msra.mxu0 0.0
      %755 = vmatprep.subr.mxu0 0.0
      %756 = vmatpush1.msra.mxu0 0.0
      %757 = vmatprep.subr.mxu0 0.0
      %758 = vmatpush1.msra.mxu0 0.0
      %759 = vmatprep.subr.mxu0 0.0
      %760 = vmatpush1.msra.mxu0 0.0
      %761 = vmatprep.subr.mxu0 0.0
      %762 = vmatpush1.msra.mxu0 0.0
      %763 = vmatprep.subr.mxu0 0.0
      %764 = vmatpush1.msra.mxu0 0.0
      %765 = vmatprep.subr.mxu0 0.0
      %766 = vmatpush1.msra.mxu0 0.0
      %767 = vmatprep.subr.mxu0 0.0
      %768 = vmatpush1.msra.mxu0 0.0
      %769 = vmatprep.subr.mxu0 0.0
      %770 = vmatpush1.msra.mxu0 0.0
      %771 = vmatprep.subr.mxu0 0.0
      %772 = vmatpush1.msra.mxu0 0.0
      %773 = vmatprep.subr.mxu0 0.0
      %774 = vmatpush1.msra.mxu0 0.0
      %775 = vmatprep.subr.mxu0 0.0
      %776 = vmatpush1.msra.mxu0 0.0
      %777 = vmatprep.subr.mxu0 0.0
      %778 = vmatpush1.msra.mxu0 0.0
      %779 = vmatprep.subr.mxu0 0.0
      %780 = vmatpush1.msra.mxu0 0.0
      %781 = vmatprep.subr.mxu0 0.0
      %782 = vmatpush1.msra.mxu0 0.0
      %783 = vmatprep.subr.mxu0 0.0
      %784 = vmatpush1.msra.mxu0 0.0
      %785 = vmatprep.subr.mxu0 0.0
      %786 = vmatpush1.msra.mxu0 0.0
      %787 = vmatprep.subr.mxu0 0.0
      %788 = vmatpush1.msra.mxu0 0.0
      %789 = vmatprep.subr.mxu0 0.0
      %790 = vmatpush1.msra.mxu0 0.0
      %791 = vmatprep.subr.mxu0 0.0
      %792 = vmatpush1.msra.mxu0 0.0
      %793 = vmatprep.subr.mxu0 0.0
      %794 = vmatpush1.msra.mxu0 0.0
      %795 = vmatprep.subr.mxu0 0.0
      %796 = vmatpush1.msra.mxu0 0.0
      %797 = vmatprep.subr.mxu0 0.0
      %798 = vmatpush1.msra.mxu0 0.0
      %799 = vmatprep.subr.mxu0 0.0
      %800 = vmatpush1.msra.mxu0 0.0
      %801 = vmatprep.subr.mxu0 0.0
      %802 = vmatpush1.msra.mxu0 0.0
      %803 = vmatprep.subr.mxu0 0.0
      %804 = vmatpush1.msra.mxu0 0.0
      %805 = vmatprep.mubr.f32.mxu0 0.0
      %806 = vmatmul.mubr.f32.gmra.mrb[0].mxu0 %v739
      %v807 = vpop.f32.mrb[0].mxu0
      %v808 = vadd.f32 0.0, %v807
      %v809 = vpop.f32.mrb[0].mxu0
      %810 = vdwg.mxu0
      %v812 = vsel %vm299, %v210, 0
      %814 = vmatprep.subr.mxu0 0.0
      %815 = vmatpush1.msra.mxu0 %v254
      %816 = vmatprep.subr.mxu0 0.0
      %817 = vmatpush1.msra.mxu0 %v255
      %818 = vmatprep.subr.mxu0 0.0
      %819 = vmatpush1.msra.mxu0 %v256
      %820 = vmatprep.subr.mxu0 0.0
      %821 = vmatpush1.msra.mxu0 %v257
      %822 = vmatprep.subr.mxu0 0.0
      %823 = vmatpush1.msra.mxu0 %v258
      %824 = vmatprep.subr.mxu0 0.0
      %825 = vmatpush1.msra.mxu0 0.0
      %826 = vmatprep.subr.mxu0 0.0
      %827 = vmatpush1.msra.mxu0 0.0
      %828 = vmatprep.subr.mxu0 0.0
      %829 = vmatpush1.msra.mxu0 0.0
      %830 = vmatprep.subr.mxu0 0.0
      %831 = vmatpush1.msra.mxu0 0.0
      %832 = vmatprep.subr.mxu0 0.0
      %833 = vmatpush1.msra.mxu0 0.0
      %834 = vmatprep.subr.mxu0 0.0
      %835 = vmatpush1.msra.mxu0 0.0
      %836 = vmatprep.subr.mxu0 0.0
      %837 = vmatpush1.msra.mxu0 0.0
      %838 = vmatprep.subr.mxu0 0.0
      %839 = vmatpush1.msra.mxu0 0.0
      %840 = vmatprep.subr.mxu0 0.0
      %841 = vmatpush1.msra.mxu0 0.0
      %842 = vmatprep.subr.mxu0 0.0
      %843 = vmatpush1.msra.mxu0 0.0
      %844 = vmatprep.subr.mxu0 0.0
      %845 = vmatpush1.msra.mxu0 0.0
      %846 = vmatprep.subr.mxu0 0.0
      %847 = vmatpush1.msra.mxu0 0.0
      %848 = vmatprep.subr.mxu0 0.0
      %849 = vmatpush1.msra.mxu0 0.0
      %850 = vmatprep.subr.mxu0 0.0
      %851 = vmatpush1.msra.mxu0 0.0
      %852 = vmatprep.subr.mxu0 0.0
      %853 = vmatpush1.msra.mxu0 0.0
      %854 = vmatprep.subr.mxu0 0.0
      %855 = vmatpush1.msra.mxu0 0.0
      %856 = vmatprep.subr.mxu0 0.0
      %857 = vmatpush1.msra.mxu0 0.0
      %858 = vmatprep.subr.mxu0 0.0
      %859 = vmatpush1.msra.mxu0 0.0
      %860 = vmatprep.subr.mxu0 0.0
      %861 = vmatpush1.msra.mxu0 0.0
      %862 = vmatprep.subr.mxu0 0.0
      %863 = vmatpush1.msra.mxu0 0.0
      %864 = vmatprep.subr.mxu0 0.0
      %865 = vmatpush1.msra.mxu0 0.0
      %866 = vmatprep.subr.mxu0 0.0
      %867 = vmatpush1.msra.mxu0 0.0
      %868 = vmatprep.subr.mxu0 0.0
      %869 = vmatpush1.msra.mxu0 0.0
      %870 = vmatprep.subr.mxu0 0.0
      %871 = vmatpush1.msra.mxu0 0.0
      %872 = vmatprep.subr.mxu0 0.0
      %873 = vmatpush1.msra.mxu0 0.0
      %874 = vmatprep.subr.mxu0 0.0
      %875 = vmatpush1.msra.mxu0 0.0
      %876 = vmatprep.subr.mxu0 0.0
      %877 = vmatpush1.msra.mxu0 0.0
      %878 = vmatprep.mubr.f32.mxu0 0.0
      %879 = vmatmul.mubr.f32.gmra.mrb[0].mxu0 %v812
      %v880 = vpop.f32.mrb[0].mxu0
      %v881 = vadd.f32 0.0, %v880
      %v882 = vpop.f32.mrb[0].mxu0
      %883 = vdwg.mxu0
      %v885 = vsel %vm299, %v211, 0
      %887 = vmatprep.subr.mxu0 0.0
      %888 = vmatpush1.msra.mxu0 %v259
      %889 = vmatprep.subr.mxu0 0.0
      %890 = vmatpush1.msra.mxu0 %v260
      %891 = vmatprep.subr.mxu0 0.0
      %892 = vmatpush1.msra.mxu0 %v261
      %893 = vmatprep.subr.mxu0 0.0
      %894 = vmatpush1.msra.mxu0 %v262
      %895 = vmatprep.subr.mxu0 0.0
      %896 = vmatpush1.msra.mxu0 %v263
      %897 = vmatprep.subr.mxu0 0.0
      %898 = vmatpush1.msra.mxu0 0.0
      %899 = vmatprep.subr.mxu0 0.0
      %900 = vmatpush1.msra.mxu0 0.0
      %901 = vmatprep.subr.mxu0 0.0
      %902 = vmatpush1.msra.mxu0 0.0
      %903 = vmatprep.subr.mxu0 0.0
      %904 = vmatpush1.msra.mxu0 0.0
      %905 = vmatprep.subr.mxu0 0.0
      %906 = vmatpush1.msra.mxu0 0.0
      %907 = vmatprep.subr.mxu0 0.0
      %908 = vmatpush1.msra.mxu0 0.0
      %909 = vmatprep.subr.mxu0 0.0
      %910 = vmatpush1.msra.mxu0 0.0
      %911 = vmatprep.subr.mxu0 0.0
      %912 = vmatpush1.msra.mxu0 0.0
      %913 = vmatprep.subr.mxu0 0.0
      %914 = vmatpush1.msra.mxu0 0.0
      %915 = vmatprep.subr.mxu0 0.0
      %916 = vmatpush1.msra.mxu0 0.0
      %917 = vmatprep.subr.mxu0 0.0
      %918 = vmatpush1.msra.mxu0 0.0
      %919 = vmatprep.subr.mxu0 0.0
      %920 = vmatpush1.msra.mxu0 0.0
      %921 = vmatprep.subr.mxu0 0.0
      %922 = vmatpush1.msra.mxu0 0.0
      %923 = vmatprep.subr.mxu0 0.0
      %924 = vmatpush1.msra.mxu0 0.0
      %925 = vmatprep.subr.mxu0 0.0
      %926 = vmatpush1.msra.mxu0 0.0
      %927 = vmatprep.subr.mxu0 0.0
      %928 = vmatpush1.msra.mxu0 0.0
      %929 = vmatprep.subr.mxu0 0.0
      %930 = vmatpush1.msra.mxu0 0.0
      %931 = vmatprep.subr.mxu0 0.0
      %932 = vmatpush1.msra.mxu0 0.0
      %933 = vmatprep.subr.mxu0 0.0
      %934 = vmatpush1.msra.mxu0 0.0
      %935 = vmatprep.subr.mxu0 0.0
      %936 = vmatpush1.msra.mxu0 0.0
      %937 = vmatprep.subr.mxu0 0.0
      %938 = vmatpush1.msra.mxu0 0.0
      %939 = vmatprep.subr.mxu0 0.0
      %940 = vmatpush1.msra.mxu0 0.0
      %941 = vmatprep.subr.mxu0 0.0
      %942 = vmatpush1.msra.mxu0 0.0
      %943 = vmatprep.subr.mxu0 0.0
      %944 = vmatpush1.msra.mxu0 0.0
      %945 = vmatprep.subr.mxu0 0.0
      %946 = vmatpush1.msra.mxu0 0.0
      %947 = vmatprep.subr.mxu0 0.0
      %948 = vmatpush1.msra.mxu0 0.0
      %949 = vmatprep.subr.mxu0 0.0
      %950 = vmatpush1.msra.mxu0 0.0
      %951 = vmatprep.mubr.f32.mxu0 0.0
      %952 = vmatmul.mubr.f32.gmra.mrb[0].mxu0 %v885
      %v953 = vpop.f32.mrb[0].mxu0
      %v954 = vadd.f32 0.0, %v953
      %v955 = vpop.f32.mrb[0].mxu0
      %956 = vdwg.mxu0
      %v958 = vsel %vm299, %v212, 0
      %960 = vmatprep.subr.mxu0 0.0
      %961 = vmatpush1.msra.mxu0 %v264
      %962 = vmatprep.subr.mxu0 0.0
      %963 = vmatpush1.msra.mxu0 %v265
      %964 = vmatprep.subr.mxu0 0.0
      %965 = vmatpush1.msra.mxu0 %v266
      %966 = vmatprep.subr.mxu0 0.0
      %967 = vmatpush1.msra.mxu0 %v267
      %968 = vmatprep.subr.mxu0 0.0
      %969 = vmatpush1.msra.mxu0 %v268
      %970 = vmatprep.subr.mxu0 0.0
      %971 = vmatpush1.msra.mxu0 0.0
      %972 = vmatprep.subr.mxu0 0.0
      %973 = vmatpush1.msra.mxu0 0.0
      %974 = vmatprep.subr.mxu0 0.0
      %975 = vmatpush1.msra.mxu0 0.0
      %976 = vmatprep.subr.mxu0 0.0
      %977 = vmatpush1.msra.mxu0 0.0
      %978 = vmatprep.subr.mxu0 0.0
      %979 = vmatpush1.msra.mxu0 0.0
      %980 = vmatprep.subr.mxu0 0.0
      %981 = vmatpush1.msra.mxu0 0.0
      %982 = vmatprep.subr.mxu0 0.0
      %983 = vmatpush1.msra.mxu0 0.0
      %984 = vmatprep.subr.mxu0 0.0
      %985 = vmatpush1.msra.mxu0 0.0
      %986 = vmatprep.subr.mxu0 0.0
      %987 = vmatpush1.msra.mxu0 0.0
      %988 = vmatprep.subr.mxu0 0.0
      %989 = vmatpush1.msra.mxu0 0.0
      %990 = vmatprep.subr.mxu0 0.0
      %991 = vmatpush1.msra.mxu0 0.0
      %992 = vmatprep.subr.mxu0 0.0
      %993 = vmatpush1.msra.mxu0 0.0
      %994 = vmatprep.subr.mxu0 0.0
      %995 = vmatpush1.msra.mxu0 0.0
      %996 = vmatprep.subr.mxu0 0.0
      %997 = vmatpush1.msra.mxu0 0.0
      %998 = vmatprep.subr.mxu0 0.0
      %999 = vmatpush1.msra.mxu0 0.0
      %1000 = vmatprep.subr.mxu0 0.0
      %1001 = vmatpush1.msra.mxu0 0.0
      %1002 = vmatprep.subr.mxu0 0.0
      %1003 = vmatpush1.msra.mxu0 0.0
      %1004 = vmatprep.subr.mxu0 0.0
      %1005 = vmatpush1.msra.mxu0 0.0
      %1006 = vmatprep.subr.mxu0 0.0
      %1007 = vmatpush1.msra.mxu0 0.0
      %1008 = vmatprep.subr.mxu0 0.0
      %1009 = vmatpush1.msra.mxu0 0.0
      %1010 = vmatprep.subr.mxu0 0.0
      %1011 = vmatpush1.msra.mxu0 0.0
      %1012 = vmatprep.subr.mxu0 0.0
      %1013 = vmatpush1.msra.mxu0 0.0
      %1014 = vmatprep.subr.mxu0 0.0
      %1015 = vmatpush1.msra.mxu0 0.0
      %1016 = vmatprep.subr.mxu0 0.0
      %1017 = vmatpush1.msra.mxu0 0.0
      %1018 = vmatprep.subr.mxu0 0.0
      %1019 = vmatpush1.msra.mxu0 0.0
      %1020 = vmatprep.subr.mxu0 0.0
      %1021 = vmatpush1.msra.mxu0 0.0
      %1022 = vmatprep.subr.mxu0 0.0
      %1023 = vmatpush1.msra.mxu0 0.0
      %1024 = vmatprep.mubr.f32.mxu0 0.0
      %1025 = vmatmul.mubr.f32.gmra.mrb[0].mxu0 %v958
      %v1026 = vpop.f32.mrb[0].mxu0
      %v1027 = vadd.f32 0.0, %v1026
      %v1028 = vpop.f32.mrb[0].mxu0
      %1029 = vdwg.mxu0
      %v1031 = vsel %vm299, %v213, 0
      %1033 = vmatprep.subr.mxu0 0.0
      %1034 = vmatpush1.msra.mxu0 %v269
      %1035 = vmatprep.subr.mxu0 0.0
      %1036 = vmatpush1.msra.mxu0 %v270
      %1037 = vmatprep.subr.mxu0 0.0
      %1038 = vmatpush1.msra.mxu0 %v271
      %1039 = vmatprep.subr.mxu0 0.0
      %1040 = vmatpush1.msra.mxu0 %v272
      %1041 = vmatprep.subr.mxu0 0.0
      %1042 = vmatpush1.msra.mxu0 %v273
      %1043 = vmatprep.subr.mxu0 0.0
      %1044 = vmatpush1.msra.mxu0 0.0
      %1045 = vmatprep.subr.mxu0 0.0
      %1046 = vmatpush1.msra.mxu0 0.0
      %1047 = vmatprep.subr.mxu0 0.0
      %1048 = vmatpush1.msra.mxu0 0.0
      %1049 = vmatprep.subr.mxu0 0.0
      %1050 = vmatpush1.msra.mxu0 0.0
      %1051 = vmatprep.subr.mxu0 0.0
      %1052 = vmatpush1.msra.mxu0 0.0
      %1053 = vmatprep.subr.mxu0 0.0
      %1054 = vmatpush1.msra.mxu0 0.0
      %1055 = vmatprep.subr.mxu0 0.0
      %1056 = vmatpush1.msra.mxu0 0.0
      %1057 = vmatprep.subr.mxu0 0.0
      %1058 = vmatpush1.msra.mxu0 0.0
      %1059 = vmatprep.subr.mxu0 0.0
      %1060 = vmatpush1.msra.mxu0 0.0
      %1061 = vmatprep.subr.mxu0 0.0
      %1062 = vmatpush1.msra.mxu0 0.0
      %1063 = vmatprep.subr.mxu0 0.0
      %1064 = vmatpush1.msra.mxu0 0.0
      %1065 = vmatprep.subr.mxu0 0.0
      %1066 = vmatpush1.msra.mxu0 0.0
      %1067 = vmatprep.subr.mxu0 0.0
      %1068 = vmatpush1.msra.mxu0 0.0
      %1069 = vmatprep.subr.mxu0 0.0
      %1070 = vmatpush1.msra.mxu0 0.0
      %1071 = vmatprep.subr.mxu0 0.0
      %1072 = vmatpush1.msra.mxu0 0.0
      %1073 = vmatprep.subr.mxu0 0.0
      %1074 = vmatpush1.msra.mxu0 0.0
      %1075 = vmatprep.subr.mxu0 0.0
      %1076 = vmatpush1.msra.mxu0 0.0
      %1077 = vmatprep.subr.mxu0 0.0
      %1078 = vmatpush1.msra.mxu0 0.0
      %1079 = vmatprep.subr.mxu0 0.0
      %1080 = vmatpush1.msra.mxu0 0.0
      %1081 = vmatprep.subr.mxu0 0.0
      %1082 = vmatpush1.msra.mxu0 0.0
      %1083 = vmatprep.subr.mxu0 0.0
      %1084 = vmatpush1.msra.mxu0 0.0
      %1085 = vmatprep.subr.mxu0 0.0
      %1086 = vmatpush1.msra.mxu0 0.0
      %1087 = vmatprep.subr.mxu0 0.0
      %1088 = vmatpush1.msra.mxu0 0.0
      %1089 = vmatprep.subr.mxu0 0.0
      %1090 = vmatpush1.msra.mxu0 0.0
      %1091 = vmatprep.subr.mxu0 0.0
      %1092 = vmatpush1.msra.mxu0 0.0
      %1093 = vmatprep.subr.mxu0 0.0
      %1094 = vmatpush1.msra.mxu0 0.0
      %1095 = vmatprep.subr.mxu0 0.0
      %1096 = vmatpush1.msra.mxu0 0.0
      %1097 = vmatprep.mubr.f32.mxu0 0.0
      %1098 = vmatmul.mubr.f32.gmra.mrb[0].mxu0 %v1031
      %v1099 = vpop.f32.mrb[0].mxu0
      %v1100 = vadd.f32 0.0, %v1099
      %v1101 = vpop.f32.mrb[0].mxu0
      %1102 = vdwg.mxu0
      %v1104 = vsel %vm299, %v214, 0
      %1106 = vmatprep.subr.mxu0 0.0
      %1107 = vmatpush1.msra.mxu0 %v274
      %1108 = vmatprep.subr.mxu0 0.0
      %1109 = vmatpush1.msra.mxu0 %v275
      %1110 = vmatprep.subr.mxu0 0.0
      %1111 = vmatpush1.msra.mxu0 %v276
      %1112 = vmatprep.subr.mxu0 0.0
      %1113 = vmatpush1.msra.mxu0 %v277
      %1114 = vmatprep.subr.mxu0 0.0
      %1115 = vmatpush1.msra.mxu0 %v278
      %1116 = vmatprep.subr.mxu0 0.0
      %1117 = vmatpush1.msra.mxu0 0.0
      %1118 = vmatprep.subr.mxu0 0.0
      %1119 = vmatpush1.msra.mxu0 0.0
      %1120 = vmatprep.subr.mxu0 0.0
      %1121 = vmatpush1.msra.mxu0 0.0
      %1122 = vmatprep.subr.mxu0 0.0
      %1123 = vmatpush1.msra.mxu0 0.0
      %1124 = vmatprep.subr.mxu0 0.0
      %1125 = vmatpush1.msra.mxu0 0.0
      %1126 = vmatprep.subr.mxu0 0.0
      %1127 = vmatpush1.msra.mxu0 0.0
      %1128 = vmatprep.subr.mxu0 0.0
      %1129 = vmatpush1.msra.mxu0 0.0
      %1130 = vmatprep.subr.mxu0 0.0
      %1131 = vmatpush1.msra.mxu0 0.0
      %1132 = vmatprep.subr.mxu0 0.0
      %1133 = vmatpush1.msra.mxu0 0.0
      %1134 = vmatprep.subr.mxu0 0.0
      %1135 = vmatpush1.msra.mxu0 0.0
      %1136 = vmatprep.subr.mxu0 0.0
      %1137 = vmatpush1.msra.mxu0 0.0
      %1138 = vmatprep.subr.mxu0 0.0
      %1139 = vmatpush1.msra.mxu0 0.0
      %1140 = vmatprep.subr.mxu0 0.0
      %1141 = vmatpush1.msra.mxu0 0.0
      %1142 = vmatprep.subr.mxu0 0.0
      %1143 = vmatpush1.msra.mxu0 0.0
      %1144 = vmatprep.subr.mxu0 0.0
      %1145 = vmatpush1.msra.mxu0 0.0
      %1146 = vmatprep.subr.mxu0 0.0
      %1147 = vmatpush1.msra.mxu0 0.0
      %1148 = vmatprep.subr.mxu0 0.0
      %1149 = vmatpush1.msra.mxu0 0.0
      %1150 = vmatprep.subr.mxu0 0.0
      %1151 = vmatpush1.msra.mxu0 0.0
      %1152 = vmatprep.subr.mxu0 0.0
      %1153 = vmatpush1.msra.mxu0 0.0
      %1154 = vmatprep.subr.mxu0 0.0
      %1155 = vmatpush1.msra.mxu0 0.0
      %1156 = vmatprep.subr.mxu0 0.0
      %1157 = vmatpush1.msra.mxu0 0.0
      %1158 = vmatprep.subr.mxu0 0.0
      %1159 = vmatpush1.msra.mxu0 0.0
      %1160 = vmatprep.subr.mxu0 0.0
      %1161 = vmatpush1.msra.mxu0 0.0
      %1162 = vmatprep.subr.mxu0 0.0
      %1163 = vmatpush1.msra.mxu0 0.0
      %1164 = vmatprep.subr.mxu0 0.0
      %1165 = vmatpush1.msra.mxu0 0.0
      %1166 = vmatprep.subr.mxu0 0.0
      %1167 = vmatpush1.msra.mxu0 0.0
      %1168 = vmatprep.subr.mxu0 0.0
      %1169 = vmatpush1.msra.mxu0 0.0
      %1170 = vmatprep.mubr.f32.mxu0 0.0
      %1171 = vmatmul.mubr.f32.gmra.mrb[0].mxu0 %v1104
      %v1172 = vpop.f32.mrb[0].mxu0
      %v1173 = vadd.f32 0.0, %v1172
      %v1174 = vpop.f32.mrb[0].mxu0
      %1175 = vdwg.mxu0
      %v1177 = vsel %vm299, %v215, 0
      %1179 = vmatprep.subr.mxu0 0.0
      %1180 = vmatpush1.msra.mxu0 %v279
      %1181 = vmatprep.subr.mxu0 0.0
      %1182 = vmatpush1.msra.mxu0 %v280
      %1183 = vmatprep.subr.mxu0 0.0
      %1184 = vmatpush1.msra.mxu0 %v281
      %1185 = vmatprep.subr.mxu0 0.0
      %1186 = vmatpush1.msra.mxu0 %v282
      %1187 = vmatprep.subr.mxu0 0.0
      %1188 = vmatpush1.msra.mxu0 %v283
      %1189 = vmatprep.subr.mxu0 0.0
      %1190 = vmatpush1.msra.mxu0 0.0
      %1191 = vmatprep.subr.mxu0 0.0
      %1192 = vmatpush1.msra.mxu0 0.0
      %1193 = vmatprep.subr.mxu0 0.0
      %1194 = vmatpush1.msra.mxu0 0.0
      %1195 = vmatprep.subr.mxu0 0.0
      %1196 = vmatpush1.msra.mxu0 0.0
      %1197 = vmatprep.subr.mxu0 0.0
      %1198 = vmatpush1.msra.mxu0 0.0
      %1199 = vmatprep.subr.mxu0 0.0
      %1200 = vmatpush1.msra.mxu0 0.0
      %1201 = vmatprep.subr.mxu0 0.0
      %1202 = vmatpush1.msra.mxu0 0.0
      %1203 = vmatprep.subr.mxu0 0.0
      %1204 = vmatpush1.msra.mxu0 0.0
      %1205 = vmatprep.subr.mxu0 0.0
      %1206 = vmatpush1.msra.mxu0 0.0
      %1207 = vmatprep.subr.mxu0 0.0
      %1208 = vmatpush1.msra.mxu0 0.0
      %1209 = vmatprep.subr.mxu0 0.0
      %1210 = vmatpush1.msra.mxu0 0.0
      %1211 = vmatprep.subr.mxu0 0.0
      %1212 = vmatpush1.msra.mxu0 0.0
      %1213 = vmatprep.subr.mxu0 0.0
      %1214 = vmatpush1.msra.mxu0 0.0
      %1215 = vmatprep.subr.mxu0 0.0
      %1216 = vmatpush1.msra.mxu0 0.0
      %1217 = vmatprep.subr.mxu0 0.0
      %1218 = vmatpush1.msra.mxu0 0.0
      %1219 = vmatprep.subr.mxu0 0.0
      %1220 = vmatpush1.msra.mxu0 0.0
      %1221 = vmatprep.subr.mxu0 0.0
      %1222 = vmatpush1.msra.mxu0 0.0
      %1223 = vmatprep.subr.mxu0 0.0
      %1224 = vmatpush1.msra.mxu0 0.0
      %1225 = vmatprep.subr.mxu0 0.0
      %1226 = vmatpush1.msra.mxu0 0.0
      %1227 = vmatprep.subr.mxu0 0.0
      %1228 = vmatpush1.msra.mxu0 0.0
      %1229 = vmatprep.subr.mxu0 0.0
      %1230 = vmatpush1.msra.mxu0 0.0
      %1231 = vmatprep.subr.mxu0 0.0
      %1232 = vmatpush1.msra.mxu0 0.0
      %1233 = vmatprep.subr.mxu0 0.0
      %1234 = vmatpush1.msra.mxu0 0.0
      %1235 = vmatprep.subr.mxu0 0.0
      %1236 = vmatpush1.msra.mxu0 0.0
      %1237 = vmatprep.subr.mxu0 0.0
      %1238 = vmatpush1.msra.mxu0 0.0
      %1239 = vmatprep.subr.mxu0 0.0
      %1240 = vmatpush1.msra.mxu0 0.0
      %1241 = vmatprep.subr.mxu0 0.0
      %1242 = vmatpush1.msra.mxu0 0.0
      %1243 = vmatprep.mubr.f32.mxu0 0.0
      %1244 = vmatmul.mubr.f32.gmra.mrb[0].mxu0 %v1177
      %v1245 = vpop.f32.mrb[0].mxu0
      %v1246 = vadd.f32 0.0, %v1245
      %v1247 = vpop.f32.mrb[0].mxu0
      %1248 = vdwg.mxu0
      %v1250 = vsel %vm299, %v216, 0
      %1252 = vmatprep.subr.mxu0 0.0
      %1253 = vmatpush1.msra.mxu0 %v284
      %1254 = vmatprep.subr.mxu0 0.0
      %1255 = vmatpush1.msra.mxu0 %v285
      %1256 = vmatprep.subr.mxu0 0.0
      %1257 = vmatpush1.msra.mxu0 %v286
      %1258 = vmatprep.subr.mxu0 0.0
      %1259 = vmatpush1.msra.mxu0 %v287
      %1260 = vmatprep.subr.mxu0 0.0
      %1261 = vmatpush1.msra.mxu0 %v288
      %1262 = vmatprep.subr.mxu0 0.0
      %1263 = vmatpush1.msra.mxu0 0.0
      %1264 = vmatprep.subr.mxu0 0.0
      %1265 = vmatpush1.msra.mxu0 0.0
      %1266 = vmatprep.subr.mxu0 0.0
      %1267 = vmatpush1.msra.mxu0 0.0
      %1268 = vmatprep.subr.mxu0 0.0
      %1269 = vmatpush1.msra.mxu0 0.0
      %1270 = vmatprep.subr.mxu0 0.0
      %1271 = vmatpush1.msra.mxu0 0.0
      %1272 = vmatprep.subr.mxu0 0.0
      %1273 = vmatpush1.msra.mxu0 0.0
      %1274 = vmatprep.subr.mxu0 0.0
      %1275 = vmatpush1.msra.mxu0 0.0
      %1276 = vmatprep.subr.mxu0 0.0
      %1277 = vmatpush1.msra.mxu0 0.0
      %1278 = vmatprep.subr.mxu0 0.0
      %1279 = vmatpush1.msra.mxu0 0.0
      %1280 = vmatprep.subr.mxu0 0.0
      %1281 = vmatpush1.msra.mxu0 0.0
      %1282 = vmatprep.subr.mxu0 0.0
      %1283 = vmatpush1.msra.mxu0 0.0
      %1284 = vmatprep.subr.mxu0 0.0
      %1285 = vmatpush1.msra.mxu0 0.0
      %1286 = vmatprep.subr.mxu0 0.0
      %1287 = vmatpush1.msra.mxu0 0.0
      %1288 = vmatprep.subr.mxu0 0.0
      %1289 = vmatpush1.msra.mxu0 0.0
      %1290 = vmatprep.subr.mxu0 0.0
      %1291 = vmatpush1.msra.mxu0 0.0
      %1292 = vmatprep.subr.mxu0 0.0
      %1293 = vmatpush1.msra.mxu0 0.0
      %1294 = vmatprep.subr.mxu0 0.0
      %1295 = vmatpush1.msra.mxu0 0.0
      %1296 = vmatprep.subr.mxu0 0.0
      %1297 = vmatpush1.msra.mxu0 0.0
      %1298 = vmatprep.subr.mxu0 0.0
      %1299 = vmatpush1.msra.mxu0 0.0
      %1300 = vmatprep.subr.mxu0 0.0
      %1301 = vmatpush1.msra.mxu0 0.0
      %1302 = vmatprep.subr.mxu0 0.0
      %1303 = vmatpush1.msra.mxu0 0.0
      %1304 = vmatprep.subr.mxu0 0.0
      %1305 = vmatpush1.msra.mxu0 0.0
      %1306 = vmatprep.subr.mxu0 0.0
      %1307 = vmatpush1.msra.mxu0 0.0
      %1308 = vmatprep.subr.mxu0 0.0
      %1309 = vmatpush1.msra.mxu0 0.0
      %1310 = vmatprep.subr.mxu0 0.0
      %1311 = vmatpush1.msra.mxu0 0.0
      %1312 = vmatprep.subr.mxu0 0.0
      %1313 = vmatpush1.msra.mxu0 0.0
      %1314 = vmatprep.subr.mxu0 0.0
      %1315 = vmatpush1.msra.mxu0 0.0
      %1316 = vmatprep.mubr.f32.mxu0 0.0
      %1317 = vmatmul.mubr.f32.gmra.mrb[0].mxu0 %v1250
      %v1318 = vpop.f32.mrb[0].mxu0
      %v1319 = vadd.f32 0.0, %v1318
      %v1320 = vpop.f32.mrb[0].mxu0
      %1321 = vdwg.mxu0
      %v1323 = vsel %vm299, %v217, 0
      %1325 = vmatprep.subr.mxu0 0.0
      %1326 = vmatpush1.msra.mxu0 %v289
      %1327 = vmatprep.subr.mxu0 0.0
      %1328 = vmatpush1.msra.mxu0 %v290
      %1329 = vmatprep.subr.mxu0 0.0
      %1330 = vmatpush1.msra.mxu0 %v291
      %1331 = vmatprep.subr.mxu0 0.0
      %1332 = vmatpush1.msra.mxu0 %v292
      %1333 = vmatprep.subr.mxu0 0.0
      %1334 = vmatpush1.msra.mxu0 %v293
      %1335 = vmatprep.subr.mxu0 0.0
      %1336 = vmatpush1.msra.mxu0 0.0
      %1337 = vmatprep.subr.mxu0 0.0
      %1338 = vmatpush1.msra.mxu0 0.0
      %1339 = vmatprep.subr.mxu0 0.0
      %1340 = vmatpush1.msra.mxu0 0.0
      %1341 = vmatprep.subr.mxu0 0.0
      %1342 = vmatpush1.msra.mxu0 0.0
      %1343 = vmatprep.subr.mxu0 0.0
      %1344 = vmatpush1.msra.mxu0 0.0
      %1345 = vmatprep.subr.mxu0 0.0
      %1346 = vmatpush1.msra.mxu0 0.0
      %1347 = vmatprep.subr.mxu0 0.0
      %1348 = vmatpush1.msra.mxu0 0.0
      %1349 = vmatprep.subr.mxu0 0.0
      %1350 = vmatpush1.msra.mxu0 0.0
      %1351 = vmatprep.subr.mxu0 0.0
      %1352 = vmatpush1.msra.mxu0 0.0
      %1353 = vmatprep.subr.mxu0 0.0
      %1354 = vmatpush1.msra.mxu0 0.0
      %1355 = vmatprep.subr.mxu0 0.0
      %1356 = vmatpush1.msra.mxu0 0.0
      %1357 = vmatprep.subr.mxu0 0.0
      %1358 = vmatpush1.msra.mxu0 0.0
      %1359 = vmatprep.subr.mxu0 0.0
      %1360 = vmatpush1.msra.mxu0 0.0
      %1361 = vmatprep.subr.mxu0 0.0
      %1362 = vmatpush1.msra.mxu0 0.0
      %1363 = vmatprep.subr.mxu0 0.0
      %1364 = vmatpush1.msra.mxu0 0.0
      %1365 = vmatprep.subr.mxu0 0.0
      %1366 = vmatpush1.msra.mxu0 0.0
      %1367 = vmatprep.subr.mxu0 0.0
      %1368 = vmatpush1.msra.mxu0 0.0
      %1369 = vmatprep.subr.mxu0 0.0
      %1370 = vmatpush1.msra.mxu0 0.0
      %1371 = vmatprep.subr.mxu0 0.0
      %1372 = vmatpush1.msra.mxu0 0.0
      %1373 = vmatprep.subr.mxu0 0.0
      %1374 = vmatpush1.msra.mxu0 0.0
      %1375 = vmatprep.subr.mxu0 0.0
      %1376 = vmatpush1.msra.mxu0 0.0
      %1377 = vmatprep.subr.mxu0 0.0
      %1378 = vmatpush1.msra.mxu0 0.0
      %1379 = vmatprep.subr.mxu0 0.0
      %1380 = vmatpush1.msra.mxu0 0.0
      %1381 = vmatprep.subr.mxu0 0.0
      %1382 = vmatpush1.msra.mxu0 0.0
      %1383 = vmatprep.subr.mxu0 0.0
      %1384 = vmatpush1.msra.mxu0 0.0
      %1385 = vmatprep.subr.mxu0 0.0
      %1386 = vmatpush1.msra.mxu0 0.0
      %1387 = vmatprep.subr.mxu0 0.0
      %1388 = vmatpush1.msra.mxu0 0.0
      %1389 = vmatprep.mubr.f32.mxu0 0.0
      %1390 = vmatmul.mubr.f32.gmra.mrb[0].mxu0 %v1323
      %v1391 = vpop.f32.mrb[0].mxu0
      %v1392 = vadd.f32 0.0, %v1391
      %v1393 = vpop.f32.mrb[0].mxu0
      %1394 = vdwg.mxu0
      %v1396 = vsel %vm299, %v218, 0
      %1398 = vmatprep.subr.mxu0 0.0
      %1399 = vmatpush1.msra.mxu0 %v294
      %1400 = vmatprep.subr.mxu0 0.0
      %1401 = vmatpush1.msra.mxu0 %v295
      %1402 = vmatprep.subr.mxu0 0.0
      %1403 = vmatpush1.msra.mxu0 %v296
      %1404 = vmatprep.subr.mxu0 0.0
      %1405 = vmatpush1.msra.mxu0 %v297
      %1406 = vmatprep.subr.mxu0 0.0
      %1407 = vmatpush1.msra.mxu0 %v298
      %1408 = vmatprep.subr.mxu0 0.0
      %1409 = vmatpush1.msra.mxu0 0.0
      %1410 = vmatprep.subr.mxu0 0.0
      %1411 = vmatpush1.msra.mxu0 0.0
      %1412 = vmatprep.subr.mxu0 0.0
      %1413 = vmatpush1.msra.mxu0 0.0
      %1414 = vmatprep.subr.mxu0 0.0
      %1415 = vmatpush1.msra.mxu0 0.0
      %1416 = vmatprep.subr.mxu0 0.0
      %1417 = vmatpush1.msra.mxu0 0.0
      %1418 = vmatprep.subr.mxu0 0.0
      %1419 = vmatpush1.msra.mxu0 0.0
      %1420 = vmatprep.subr.mxu0 0.0
      %1421 = vmatpush1.msra.mxu0 0.0
      %1422 = vmatprep.subr.mxu0 0.0
      %1423 = vmatpush1.msra.mxu0 0.0
      %1424 = vmatprep.subr.mxu0 0.0
      %1425 = vmatpush1.msra.mxu0 0.0
      %1426 = vmatprep.subr.mxu0 0.0
      %1427 = vmatpush1.msra.mxu0 0.0
      %1428 = vmatprep.subr.mxu0 0.0
      %1429 = vmatpush1.msra.mxu0 0.0
      %1430 = vmatprep.subr.mxu0 0.0
      %1431 = vmatpush1.msra.mxu0 0.0
      %1432 = vmatprep.subr.mxu0 0.0
      %1433 = vmatpush1.msra.mxu0 0.0
      %1434 = vmatprep.subr.mxu0 0.0
      %1435 = vmatpush1.msra.mxu0 0.0
      %1436 = vmatprep.subr.mxu0 0.0
      %1437 = vmatpush1.msra.mxu0 0.0
      %1438 = vmatprep.subr.mxu0 0.0
      %1439 = vmatpush1.msra.mxu0 0.0
      %1440 = vmatprep.subr.mxu0 0.0
      %1441 = vmatpush1.msra.mxu0 0.0
      %1442 = vmatprep.subr.mxu0 0.0
      %1443 = vmatpush1.msra.mxu0 0.0
      %1444 = vmatprep.subr.mxu0 0.0
      %1445 = vmatpush1.msra.mxu0 0.0
      %1446 = vmatprep.subr.mxu0 0.0
      %1447 = vmatpush1.msra.mxu0 0.0
      %1448 = vmatprep.subr.mxu0 0.0
      %1449 = vmatpush1.msra.mxu0 0.0
      %1450 = vmatprep.subr.mxu0 0.0
      %1451 = vmatpush1.msra.mxu0 0.0
      %1452 = vmatprep.subr.mxu0 0.0
      %1453 = vmatpush1.msra.mxu0 0.0
      %1454 = vmatprep.subr.mxu0 0.0
      %1455 = vmatpush1.msra.mxu0 0.0
      %1456 = vmatprep.subr.mxu0 0.0
      %1457 = vmatpush1.msra.mxu0 0.0
      %1458 = vmatprep.subr.mxu0 0.0
      %1459 = vmatpush1.msra.mxu0 0.0
      %1460 = vmatprep.subr.mxu0 0.0
      %1461 = vmatpush1.msra.mxu0 0.0
      %1462 = vmatprep.mubr.f32.mxu0 0.0
      %1463 = vmatmul.mubr.f32.gmra.mrb[0].mxu0 %v1396
      %v1464 = vpop.f32.mrb[0].mxu0
      %v1465 = vadd.f32 0.0, %v1464
      %v1466 = vpop.f32.mrb[0].mxu0
      %1467 = vdwg.mxu0
      %vm1468 = vcmask 320512
      %1469 = vst.msk [vmem:[%s201] sm:$0x3] %vm1468, %v370
      %1470 = vst.msk [vmem:[%s201 + $0x2] sm:$0x3] %vm1468, %v443
      %1471 = vst.msk [vmem:[%s201 + $0x4] sm:$0x3] %vm1468, %v516
      %1472 = vst.msk [vmem:[%s201 + $0x6] sm:$0x3] %vm1468, %v589
      %1473 = vst.msk [vmem:[%s201 + $0x8] sm:$0x3] %vm1468, %v662
      %1474 = vst.msk [vmem:[%s201 + $0xa] sm:$0x3] %vm1468, %v735
      %1475 = vst.msk [vmem:[%s201 + $0xc] sm:$0x3] %vm1468, %v808
      %1476 = vst.msk [vmem:[%s201 + $0xe] sm:$0x3] %vm1468, %v881
      %1477 = vst.msk [vmem:[%s201 + $0x10] sm:$0x3] %vm1468, %v954
      %1478 = vst.msk [vmem:[%s201 + $0x12] sm:$0x3] %vm1468, %v1027
      %1479 = vst.msk [vmem:[%s201 + $0x14] sm:$0x3] %vm1468, %v1100
      %1480 = vst.msk [vmem:[%s201 + $0x16] sm:$0x3] %vm1468, %v1173
      %1481 = vst.msk [vmem:[%s201 + $0x18] sm:$0x3] %vm1468, %v1246
      %1482 = vst.msk [vmem:[%s201 + $0x1a] sm:$0x3] %vm1468, %v1319
      %1483 = vst.msk [vmem:[%s201 + $0x1c] sm:$0x3] %vm1468, %v1392
      %1484 = vst.msk [vmem:[%s201 + $0x1e] sm:$0x3] %vm1468, %v1465
      %s1485 = smul.u32 16, %s17
      %p1486 = scmp.lt.s32.totalorder %s1485, 31
      %s1487 = scalar_select %p1486, %s1485, 31
      %p1488 = scmp.lt.s32.totalorder %s18, 0
      %s1489 = scalar_select %p1488, %s18, 0
      %s1490 = sadd.s32 %s1489, %s1487
      %s1491 = smul.addr %s1490, 2
      %s1492 = scalar_lea.vmem %s2, %s1491
      // Predicated region
      $region29: #{simple_block2d_forward.8} parent=27 // pred_check
        %p1493 = pneg %p99
      $region30: #{simple_block2d_forward.8} parent=27 // pred_check_branch
        %1495 = sbr.rel (%p1493) target = $region32
      $region31: #{simple_block2d_forward.8} parent=27 // pred_region
        %s1496 = smul.u32 16, %s17
      $region32: #{simple_block2d_forward.8} parent=27 // pred_fallthru
        _
    $region28: #{simple_block2d_forward.8} parent=5 // pred_fallthru
      _
    %p1497 = scmp.le.s32.totalorder 2, %s8
    // Predicated region
    $region33: #{simple_block2d_forward.8} parent=5 // pred_check
      %p1498 = pneg %p1497
    $region34: #{simple_block2d_forward.8} parent=5 // pred_check_branch
      %1500 = sbr.rel (%p1498) target = $region36
    $region35: #{simple_block2d_forward.8} parent=5 // pred_region
      %s1501 = ssub.s32 %s8, 2
      // Predicated region
      $region37: #{simple_block2d_forward.8} parent=35 // pred_check
        %p1502 = pneg %p105
      $region38: #{simple_block2d_forward.8} parent=35 // pred_check_branch
        %1504 = sbr.rel (%p1502) target = $region40
      $region39: #{simple_block2d_forward.8} parent=35 // pred_region
        %s1505 = smul.u32 16, %s19
        %p1506 = scmp.lt.s32.totalorder %s1505, 31
        %s1507 = scalar_select %p1506, %s1505, 31
        %p1508 = scmp.lt.s32.totalorder %s20, 0
        %s1509 = scalar_select %p1508, %s20, 0
        %s1510 = sadd.s32 %s1509, %s1507
        %s1511 = smul.addr %s1510, 2
        %s1512 = scalar_lea.vmem %s2, %s1511
      $region40: #{simple_block2d_forward.8} parent=35 // pred_fallthru
        _
    $region36: #{simple_block2d_forward.8} parent=5 // pred_fallthru
      _
  $region6: #{simple_block2d_forward.8} parent=0 // loop_footer
    %s12 = sadd.s32 1, %s8
  $region7: #{simple_block2d_forward.8} parent=0 // loop_footer_branch
    %7 = sbr.rel target = $region3
  $region8: #{simple_block2d_forward.8} parent=0 // loop_exit
    _

// kernel: simple_block2d_forward.9
$region0: #{simple_block2d_forward.9}
  #allocation0 [shape = 'u32[]', space=smem, size = 0x4, offset = 0x4, fixed_abs, tag = 'smem constant byte address 0x4 - core index']
  #allocation1 [shape = 'u32[144,128]{1,0:T(1,128)}', space=vmem, size = 0x12000, scoped, tag = 'internal scratch']
  %s0 = inlined_call_operand.vmem [shape: f32[2,20,256], index: 0, kind: input, shape index: {}]
  %s1 = inlined_call_operand.vmem [shape: f32[20,20], index: 1, kind: input, shape index: {}]
  %s2 = inlined_call_operand.vmem [shape: f32[20,1], index: 2, kind: input, shape index: {}]
  %s3 = inlined_call_operand.vmem [shape: f32[2,20,256], index: 3, kind: output, shape index: {}]
  %s4 = sld [smem:[#allocation0]]
  $region117: #{simple_block2d_forward.9} parent=0
    _
  %s6 = ssub.s32 1, %s4
  %s7 = scalar_select 0, %s6, %s4
  $region1: #{simple_block2d_forward.9} parent=0
    #allocation2 [shape = 'u8[24576]{0}', space=vmem, size = 0x6000, scoped, tag = 'input window, operand 0']
    #allocation3 [shape = 'u8[24576]{0}', space=vmem, size = 0x6000, scoped, tag = 'output window, operand 0']
    loop: start=0, step=1, limit=6
    $region2: #{simple_block2d_forward.9} parent=1 // loop_pre_header
      _
    $region3: #{simple_block2d_forward.9} parent=1 // loop_header
      %s9 = sphi 0, %s13
      %p10 = scmp.ge.s32.totalorder %s9, 6
      %s16 = sphi 0, %s28
      %s17 = sphi 0, %s24
      %s18 = sphi 0, %s16
      %s19 = sphi 0, %s17
      %s20 = sphi 0, %s18
      %s21 = sphi 0, %s19
      %s33 = sphi 0, %s35
      %s36 = sphi 0, %s33
      %s37 = sphi 0, %s36
      %s53 = sphi 0, %s37
      %s57 = sphi 0, %s57
      %s59 = sphi 0, %s57
      %s60 = sphi 0, %s59
      %s74 = sphi 0, %s60
      %s78 = sphi 0, %s78
      %s80 = sphi 0, %s78
      %s81 = sphi 0, %s80
      %s95 = sphi 0, %s81
      %s103 = sphi 0, %s105
      %s106 = sphi 0, %s103
      %s107 = sphi 0, %s106
      %s123 = sphi 0, %s107
    $region4: #{simple_block2d_forward.9} parent=1 // loop_header_branch
      %12 = sbr.rel (%p10) target = $region8
    $region5: #{simple_block2d_forward.9} parent=1 // loop_body
      %s14 = ssub.s32 %s9, 1
      %s15 = ssub.s32 %s9, 2
      %s22 = sadd.s32 1, %s17
      %p23 = scmp.ge.s32.totalorder %s22, 2
      %s24 = scalar_select %p23, 0, %s22
      %s25 = sadd.s32 1, %s16
      %s26 = scalar_select %p23, %s25, %s16
      %p27 = scmp.ge.s32.totalorder %s26, 2
      %s28 = scalar_select %p27, 0, %s26
      %s29 = ssub.s32 %s16, %s28
      %s30 = ssub.s32 %s17, %s24
      %s31 = sor.u32 %s29, %s30
      %p32 = scmp.eq.s32.totalorder %s31, 0
      %s34 = sadd.s32 %s33, 1
      %s35 = scalar_select %p32, %s33, %s34
      %p38 = pneg %p32
      %p39 = scmp.eq.s32.totalorder %s9, 3
      %p40 = por %p38, %p39
      %p41 = scmp.ne.s32.totalorder %s33, %s36
      %p42 = scmp.eq.s32.totalorder %s9, 0
      %p43 = por %p41, %p42
      %p44 = scmp.ne.s32.totalorder %s33, %s36
      %p45 = scmp.eq.s32.totalorder %s14, 3
      %p46 = por %p44, %p45
      %p47 = scmp.ne.s32.totalorder %s36, %s37
      %p48 = scmp.eq.s32.totalorder %s14, 0
      %p49 = por %p47, %p48
      %p50 = scmp.ne.s32.totalorder %s36, %s37
      %p51 = scmp.eq.s32.totalorder %s15, 3
      %p52 = por %p50, %p51
      %p54 = scmp.ne.s32.totalorder %s37, %s53
      %p55 = scmp.eq.s32.totalorder %s15, 0
      %p56 = por %p54, %p55
      %s58 = sadd.s32 %s57, 1
      %p61 = scmp.eq.s32.totalorder %s9, 3
      %p62 = scmp.ne.s32.totalorder %s57, %s59
      %p63 = scmp.eq.s32.totalorder %s9, 0
      %p64 = por %p62, %p63
      %p65 = scmp.ne.s32.totalorder %s57, %s59
      %p66 = scmp.eq.s32.totalorder %s14, 3
      %p67 = por %p65, %p66
      %p68 = scmp.ne.s32.totalorder %s59, %s60
      %p69 = scmp.eq.s32.totalorder %s14, 0
      %p70 = por %p68, %p69
      %p71 = scmp.ne.s32.totalorder %s59, %s60
      %p72 = scmp.eq.s32.totalorder %s15, 3
      %p73 = por %p71, %p72
      %p75 = scmp.ne.s32.totalorder %s60, %s74
      %p76 = scmp.eq.s32.totalorder %s15, 0
      %p77 = por %p75, %p76
      %s79 = sadd.s32 %s78, 1
      %p82 = scmp.eq.s32.totalorder %s9, 3
      %p83 = scmp.ne.s32.totalorder %s78, %s80
      %p84 = scmp.eq.s32.totalorder %s9, 0
      %p85 = por %p83, %p84
      %p86 = scmp.ne.s32.totalorder %s78, %s80
      %p87 = scmp.eq.s32.totalorder %s14, 3
      %p88 = por %p86, %p87
      %p89 = scmp.ne.s32.totalorder %s80, %s81
      %p90 = scmp.eq.s32.totalorder %s14, 0
      %p91 = por %p89, %p90
      %p92 = scmp.ne.s32.totalorder %s80, %s81
      %p93 = scmp.eq.s32.totalorder %s15, 3
      %p94 = por %p92, %p93
      %p96 = scmp.ne.s32.totalorder %s81, %s95
      %p97 = scmp.eq.s32.totalorder %s15, 0
      %p98 = por %p96, %p97
      %s99 = ssub.s32 %s16, %s28
      %s100 = ssub.s32 %s17, %s24
      %s101 = sor.u32 %s99, %s100
      %p102 = scmp.eq.s32.totalorder %s101, 0
      %s104 = sadd.s32 %s103, 1
      %s105 = scalar_select %p102, %s103, %s104
      %p108 = pneg %p102
      %p109 = scmp.eq.s32.totalorder %s9, 3
      %p110 = por %p108, %p109
      %p111 = scmp.ne.s32.totalorder %s103, %s106
      %p112 = scmp.eq.s32.totalorder %s9, 0
      %p113 = por %p111, %p112
      %p114 = scmp.ne.s32.totalorder %s103, %s106
      %p115 = scmp.eq.s32.totalorder %s14, 3
      %p116 = por %p114, %p115
      %p117 = scmp.ne.s32.totalorder %s106, %s107
      %p118 = scmp.eq.s32.totalorder %s14, 0
      %p119 = por %p117, %p118
      %p120 = scmp.ne.s32.totalorder %s106, %s107
      %p121 = scmp.eq.s32.totalorder %s15, 3
      %p122 = por %p120, %p121
      %p124 = scmp.ne.s32.totalorder %s107, %s123
      %p125 = scmp.eq.s32.totalorder %s15, 0
      %p126 = por %p124, %p125
      %p127 = scmp.le.s32.totalorder 1, %s9
      %p128 = scmp.lt.s32.totalorder %s9, 5
      %p129 = pnand %p127, %p128
      %p130 = pneg %p129
      // Predicated region
      $region9: #{simple_block2d_forward.9} parent=5 // pred_check
        _
      $region10: #{simple_block2d_forward.9} parent=5 // pred_check_branch
        %132 = sbr.rel (%p129) target = $region12
      $region11: #{simple_block2d_forward.9} parent=5 // pred_region
        %s133 = ssub.s32 %s9, 1
        // Predicated region
        $region13: #{simple_block2d_forward.9} parent=11 // pred_check
          %p134 = pneg %p70
        $region14: #{simple_block2d_forward.9} parent=11 // pred_check_branch
          %136 = sbr.rel (%p134) target = $region16
        $region15: #{simple_block2d_forward.9} parent=11 // pred_region
          _
        $region16: #{simple_block2d_forward.9} parent=11 // pred_fallthru
          _
        // Predicated region
        $region17: #{simple_block2d_forward.9} parent=11 // pred_check
          %p137 = pneg %p91
        $region18: #{simple_block2d_forward.9} parent=11 // pred_check_branch
          %139 = sbr.rel (%p137) target = $region20
        $region19: #{simple_block2d_forward.9} parent=11 // pred_region
          _
        $region20: #{simple_block2d_forward.9} parent=11 // pred_fallthru
          _
      $region12: #{simple_block2d_forward.9} parent=5 // pred_fallthru
        _
      %p140 = scmp.lt.s32.totalorder %s9, 4
      // Predicated region
      $region21: #{simple_block2d_forward.9} parent=5 // pred_check
        %p141 = pneg %p140
      $region22: #{simple_block2d_forward.9} parent=5 // pred_check_branch
        %143 = sbr.rel (%p141) target = $region24
      $region23: #{simple_block2d_forward.9} parent=5 // pred_region
        // Predicated region
        $region25: #{simple_block2d_forward.9} parent=23 // pred_check
          %p144 = pneg %p43
        $region26: #{simple_block2d_forward.9} parent=23 // pred_check_branch
          %146 = sbr.rel (%p144) target = $region28
        $region27: #{simple_block2d_forward.9} parent=23 // pred_region
          %s147 = sand.u32 %s33, 1
          %s148 = sand.u32 %s33, 1
          %s149 = smul.addr %s148, 24
          %s150 = scalar_lea.vmem [#allocation2], %s149
          %s151 = smul.addr %s16, 6
          %s152 = sadd.s32 %s17, %s151
          %s153 = smul.addr %s152, 8
          %s154 = scalar_lea.vmem %s0, %s153
          // Predicated region
          $region29: #{simple_block2d_forward.9} parent=27 // pred_check
            _
          $region30: #{simple_block2d_forward.9} parent=27 // pred_check_branch
            %156 = sbr.rel (0) target = $region32
          $region31: #{simple_block2d_forward.9} parent=27 // pred_region
            // Predicated region
            $region33: #{simple_block2d_forward.9} parent=31 // pred_check
              _
            $region34: #{simple_block2d_forward.9} parent=31 // pred_check_branch
              %158 = sbr.rel (0) target = $region36
            $region35: #{simple_block2d_forward.9} parent=31 // pred_region
              // Predicated region
              $region48: #{simple_block2d_forward.9} parent=35 // pred_check
                _
              $region49: #{simple_block2d_forward.9} parent=35 // pred_check_branch
                %177 = sbr.rel (0) target = $region51
              $region50: #{simple_block2d_forward.9} parent=35 // pred_region
                loop: start=0, step=1, limit=1
                $region52: #{simple_block2d_forward.9} parent=50 // loop_pre_header
                  _
                $region53: #{simple_block2d_forward.9} parent=50 // loop_header
                  %s179 = sphi 0, %s183
                  %p180 = scmp.ge.s32.totalorder %s179, 1
                  %s184 = sphi %s154, %s154
                  %s185 = sphi %s150, %s150
                $region54: #{simple_block2d_forward.9} parent=50 // loop_header_branch
                  %182 = sbr.rel (%p180) target = $region58
                $region55: #{simple_block2d_forward.9} parent=50 // loop_body
                  %v186 = vld [vmem:[%s184] sm:$0xff]
                  %187 = vst [vmem:[%s185] sm:$0xff] %v186
                  %v188 = vld [vmem:[%s184 + $0x10] sm:$0xff]
                  %189 = vst [vmem:[%s185 + $0x8] sm:$0xff] %v188
                  %v190 = vld [vmem:[%s184 + $0x20] sm:$0xff]
                  %191 = vst [vmem:[%s185 + $0x10] sm:$0xff] %v190
                $region56: #{simple_block2d_forward.9} parent=50 // loop_footer
                  %s183 = sadd.s32 1, %s179
                $region57: #{simple_block2d_forward.9} parent=50 // loop_footer_branch
                  %178 = sbr.rel target = $region53
                $region58: #{simple_block2d_forward.9} parent=50 // loop_exit
                  _
              $region51: #{simple_block2d_forward.9} parent=35 // pred_fallthru
                _
              // Predicated region
              $region59: #{simple_block2d_forward.9} parent=35 // pred_check
                _
              $region60: #{simple_block2d_forward.9} parent=35 // pred_check_branch
                %193 = sbr.rel target = $region62
              $region61: #{simple_block2d_forward.9} parent=35 // pred_region
                _
              $region62: #{simple_block2d_forward.9} parent=35 // pred_fallthru
                _
            $region36: #{simple_block2d_forward.9} parent=31 // pred_fallthru
              _
            // Predicated region
            $region37: #{simple_block2d_forward.9} parent=31 // pred_check
              _
            $region38: #{simple_block2d_forward.9} parent=31 // pred_check_branch
              %160 = sbr.rel target = $region40
            $region39: #{simple_block2d_forward.9} parent=31 // pred_region
              loop: start=0, step=1, limit=1
              $region41: #{simple_block2d_forward.9} parent=39 // loop_pre_header
                _
              $region42: #{simple_block2d_forward.9} parent=39 // loop_header
                %s163 = sphi 0, %s167
                %p164 = scmp.ge.s32.totalorder %s163, 1
                %s168 = sphi %s154, %s154
                %s169 = sphi %s150, %s150
              $region43: #{simple_block2d_forward.9} parent=39 // loop_header_branch
                %166 = sbr.rel (%p164) target = $region47
              $region44: #{simple_block2d_forward.9} parent=39 // loop_body
                %v170 = vld [vmem:[%s168] sm:$0xff]
                %171 = vst [vmem:[%s169] sm:$0xff] %v170
                %v172 = vld [vmem:[%s168 + $0x10] sm:$0xff]
                %173 = vst [vmem:[%s169 + $0x8] sm:$0xff] %v172
                %v174 = vld [vmem:[%s168 + $0x20] sm:$0xff]
                %175 = vst [vmem:[%s169 + $0x10] sm:$0xff] %v174
              $region45: #{simple_block2d_forward.9} parent=39 // loop_footer
                %s167 = sadd.s32 1, %s163
              $region46: #{simple_block2d_forward.9} parent=39 // loop_footer_branch
                %162 = sbr.rel target = $region42
              $region47: #{simple_block2d_forward.9} parent=39 // loop_exit
                _
            $region40: #{simple_block2d_forward.9} parent=31 // pred_fallthru
              _
          $region32: #{simple_block2d_forward.9} parent=27 // pred_fallthru
            _
          %194 = vnop
        $region28: #{simple_block2d_forward.9} parent=23 // pred_fallthru
          _
      $region24: #{simple_block2d_forward.9} parent=5 // pred_fallthru
        _
      %p195 = scmp.le.s32.totalorder 1, %s9
      %p196 = scmp.lt.s32.totalorder %s9, 5
      %p197 = pnand %p195, %p196
      %p198 = pneg %p197
      // Predicated region
      $region63: #{simple_block2d_forward.9} parent=5 // pred_check
        _
      $region64: #{simple_block2d_forward.9} parent=5 // pred_check_branch
        %200 = sbr.rel (%p197) target = $region66
      $region65: #{simple_block2d_forward.9} parent=5 // pred_region
        %s201 = ssub.s32 %s9, 1
        %s202 = sand.u32 %s36, 1
        %s203 = sand.u32 %s36, 1
        %s204 = smul.addr %s203, 24
        %s205 = scalar_lea.vmem [#allocation2], %s204
        // Predicated region
        $region67: #{simple_block2d_forward.9} parent=65 // pred_check
          %p206 = pneg %p49
        $region68: #{simple_block2d_forward.9} parent=65 // pred_check_branch
          %208 = sbr.rel (%p206) target = $region70
        $region69: #{simple_block2d_forward.9} parent=65 // pred_region
          _
        $region70: #{simple_block2d_forward.9} parent=65 // pred_fallthru
          _
        %s209 = sand.u32 %s36, 1
        %s210 = sand.u32 %s36, 1
        %s211 = smul.addr %s210, 24
        %s212 = scalar_lea.vmem [#allocation2], %s211
        %p213 = pneg %p49
        %p214 = pneg %p46
        %p215 = pneg %p70
        %p216 = pneg %p67
        %p217 = pneg %p91
        %p218 = pneg %p88
        %p219 = pneg %p119
        %p220 = pneg %p116
        %s221 = sand.u32 %s106, 1
        %s222 = sand.u32 %s106, 1
        %s223 = smul.addr %s222, 24
        %s224 = scalar_lea.vmem [#allocation3], %s223
        %v225 = vld [vmem:[%s1] sm:$0xff]
        %v226 = vld [vmem:[%s1 + $0x8] sm:$0xff]
        %v227 = vld [vmem:[%s1 + $0x10] sm:$0xf]
        %v228 = vld [vmem:[%s205] sm:$0xff]
        %v229 = vld [vmem:[%s205 + $0x8] sm:$0xff]
        %v230 = vld [vmem:[%s205 + $0x10] sm:$0xf]
        %v231 = vld [vmem:[%s2] sm:$0xff]
        %v232 = vld [vmem:[%s2 + $0x8] sm:$0xff]
        %v233 = vld [vmem:[%s2 + $0x10] sm:$0xf]
        %235 = vset.pattern.permute.xlu0 0
        %236 = vperm.xlu0 %235, %v231
        %v237 = vpop.permute.xlu0 %236
        %240 = vset.pattern.permute.xlu0 0
        %241 = vperm.xlu0 %240, %v232
        %v242 = vpop.permute.xlu0 %241
        %245 = vset.pattern.permute.xlu0 0
        %246 = vperm.xlu0 %245, %v233
        %v247 = vpop.permute.xlu0 %246
        %vm249 = vcmask 162816
        %v251 = vsel %vm249, %v225, 0
        %v254 = vsel %vm249, %v226, 0
        %v257 = vsel %vm249, %v227, 0
        %vm259 = vcmask 1043456
        %v261 = vsel %vm259, %v230, 0
        %263 = vmatprep.subr.mxu0 0.0
        %264 = vmatpush1.msra.mxu0 %v228
        %265 = vmatprep.subr.mxu0 0.0
        %266 = vmatpush1.msra.mxu0 %v229
        %267 = vmatprep.subr.mxu0 0.0
        %268 = vmatpush1.msra.mxu0 %v261
        %269 = vmatprep.subr.mxu0 0.0
        %270 = vmatpush1.msra.mxu0 0.0
        %271 = vmatprep.subr.mxu0 0.0
        %272 = vmatpush1.msra.mxu0 0.0
        %273 = vmatprep.subr.mxu0 0.0
        %274 = vmatpush1.msra.mxu0 0.0
        %275 = vmatprep.subr.mxu0 0.0
        %276 = vmatpush1.msra.mxu0 0.0
        %277 = vmatprep.subr.mxu0 0.0
        %278 = vmatpush1.msra.mxu0 0.0
        %279 = vmatprep.subr.mxu0 0.0
        %280 = vmatpush1.msra.mxu0 0.0
        %281 = vmatprep.subr.mxu0 0.0
        %282 = vmatpush1.msra.mxu0 0.0
        %283 = vmatprep.subr.mxu0 0.0
        %284 = vmatpush1.msra.mxu0 0.0
        %285 = vmatprep.subr.mxu0 0.0
        %286 = vmatpush1.msra.mxu0 0.0
        %287 = vmatprep.subr.mxu0 0.0
        %288 = vmatpush1.msra.mxu0 0.0
        %289 = vmatprep.subr.mxu0 0.0
        %290 = vmatpush1.msra.mxu0 0.0
        %291 = vmatprep.subr.mxu0 0.0
        %292 = vmatpush1.msra.mxu0 0.0
        %293 = vmatprep.subr.mxu0 0.0
        %294 = vmatpush1.msra.mxu0 0.0
        %295 = vmatprep.subr.mxu0 0.0
        %296 = vmatpush1.msra.mxu0 0.0
        %297 = vmatprep.subr.mxu0 0.0
        %298 = vmatpush1.msra.mxu0 0.0
        %299 = vmatprep.subr.mxu0 0.0
        %300 = vmatpush1.msra.mxu0 0.0
        %301 = vmatprep.subr.mxu0 0.0
        %302 = vmatpush1.msra.mxu0 0.0
        %303 = vmatprep.subr.mxu0 0.0
        %304 = vmatpush1.msra.mxu0 0.0
        %305 = vmatprep.subr.mxu0 0.0
        %306 = vmatpush1.msra.mxu0 0.0
        %307 = vmatprep.subr.mxu0 0.0
        %308 = vmatpush1.msra.mxu0 0.0
        %309 = vmatprep.subr.mxu0 0.0
        %310 = vmatpush1.msra.mxu0 0.0
        %311 = vmatprep.subr.mxu0 0.0
        %312 = vmatpush1.msra.mxu0 0.0
        %313 = vmatprep.subr.mxu0 0.0
        %314 = vmatpush1.msra.mxu0 0.0
        %315 = vmatprep.subr.mxu0 0.0
        %316 = vmatpush1.msra.mxu0 0.0
        %317 = vmatprep.subr.mxu0 0.0
        %318 = vmatpush1.msra.mxu0 0.0
        %319 = vmatprep.subr.mxu0 0.0
        %320 = vmatpush1.msra.mxu0 0.0
        %321 = vmatprep.subr.mxu0 0.0
        %322 = vmatpush1.msra.mxu0 0.0
        %323 = vmatprep.subr.mxu0 0.0
        %324 = vmatpush1.msra.mxu0 0.0
        %325 = vmatprep.subr.mxu0 0.0
        %326 = vmatpush1.msra.mxu0 0.0
        %327 = vmatprep.mubr.f32.mxu0 0.0
        %328 = vmatmul.mubr.f32.gmra.mrb[0].mxu0 %v251
        %v329 = vpop.f32.mrb[0].mxu0
        %v330 = vadd.f32 %v237, %v329
        %v331 = vpop.f32.mrb[0].mxu0
        %332 = vmatprep.mubr.f32.mxu0 0.0
        %333 = vmatmul.mubr.f32.gmra.mrb[0].mxu0 %v254
        %v334 = vpop.f32.mrb[0].mxu0
        %v335 = vadd.f32 %v242, %v334
        %v336 = vpop.f32.mrb[0].mxu0
        %337 = vmatprep.mubr.f32.mxu0 0.0
        %338 = vmatmul.mubr.f32.gmra.mrb[0].mxu0 %v257
        %v339 = vpop.f32.mrb[0].mxu0
        %v340 = vadd.f32 %v247, %v339
        %v341 = vpop.f32.mrb[0].mxu0
        %342 = vdwg.mxu0
        %343 = vst [vmem:[%s224] sm:$0xff] %v330
        %344 = vst [vmem:[%s224 + $0x8] sm:$0xff] %v335
        %345 = vst [vmem:[%s224 + $0x10] sm:$0xf] %v340
        %s346 = sand.u32 %s106, 1
        %s347 = sand.u32 %s106, 1
        %s348 = smul.addr %s347, 24
        %s349 = scalar_lea.vmem [#allocation3], %s348
        // Predicated region
        $region71: #{simple_block2d_forward.9} parent=65 // pred_check
          %p350 = pneg %p116
        $region72: #{simple_block2d_forward.9} parent=65 // pred_check_branch
          %352 = sbr.rel (%p350) target = $region74
        $region73: #{simple_block2d_forward.9} parent=65 // pred_region
          %s353 = smul.addr %s18, 6
          %s354 = sadd.s32 %s19, %s353
          %s355 = smul.addr %s354, 8
          %s356 = scalar_lea.vmem %s3, %s355
          // Predicated region
          $region75: #{simple_block2d_forward.9} parent=73 // pred_check
            _
          $region76: #{simple_block2d_forward.9} parent=73 // pred_check_branch
            %358 = sbr.rel (0) target = $region78
          $region77: #{simple_block2d_forward.9} parent=73 // pred_region
            // Predicated region
            $region79: #{simple_block2d_forward.9} parent=77 // pred_check
              _
            $region80: #{simple_block2d_forward.9} parent=77 // pred_check_branch
              %360 = sbr.rel (0) target = $region82
            $region81: #{simple_block2d_forward.9} parent=77 // pred_region
              // Predicated region
              $region94: #{simple_block2d_forward.9} parent=81 // pred_check
                _
              $region95: #{simple_block2d_forward.9} parent=81 // pred_check_branch
                %379 = sbr.rel (0) target = $region97
              $region96: #{simple_block2d_forward.9} parent=81 // pred_region
                loop: start=0, step=1, limit=1
                $region98: #{simple_block2d_forward.9} parent=96 // loop_pre_header
                  _
                $region99: #{simple_block2d_forward.9} parent=96 // loop_header
                  %s381 = sphi 0, %s385
                  %p382 = scmp.ge.s32.totalorder %s381, 1
                  %s386 = sphi %s349, %s349
                  %s387 = sphi %s356, %s356
                $region100: #{simple_block2d_forward.9} parent=96 // loop_header_branch
                  %384 = sbr.rel (%p382) target = $region104
                $region101: #{simple_block2d_forward.9} parent=96 // loop_body
                  %v388 = vld [vmem:[%s386] sm:$0xff]
                  %389 = vst [vmem:[%s387] sm:$0xff] %v388
                  %v390 = vld [vmem:[%s386 + $0x8] sm:$0xff]
                  %391 = vst [vmem:[%s387 + $0x10] sm:$0xff] %v390
                  %v392 = vld [vmem:[%s386 + $0x10] sm:$0xff]
                  %393 = vst [vmem:[%s387 + $0x20] sm:$0xff] %v392
                $region102: #{simple_block2d_forward.9} parent=96 // loop_footer
                  %s385 = sadd.s32 1, %s381
                $region103: #{simple_block2d_forward.9} parent=96 // loop_footer_branch
                  %380 = sbr.rel target = $region99
                $region104: #{simple_block2d_forward.9} parent=96 // loop_exit
                  _
              $region97: #{simple_block2d_forward.9} parent=81 // pred_fallthru
                _
              // Predicated region
              $region105: #{simple_block2d_forward.9} parent=81 // pred_check
                _
              $region106: #{simple_block2d_forward.9} parent=81 // pred_check_branch
                %395 = sbr.rel target = $region108
              $region107: #{simple_block2d_forward.9} parent=81 // pred_region
                _
              $region108: #{simple_block2d_forward.9} parent=81 // pred_fallthru
                _
            $region82: #{simple_block2d_forward.9} parent=77 // pred_fallthru
              _
            // Predicated region
            $region83: #{simple_block2d_forward.9} parent=77 // pred_check
              _
            $region84: #{simple_block2d_forward.9} parent=77 // pred_check_branch
              %362 = sbr.rel target = $region86
            $region85: #{simple_block2d_forward.9} parent=77 // pred_region
              loop: start=0, step=1, limit=1
              $region87: #{simple_block2d_forward.9} parent=85 // loop_pre_header
                _
              $region88: #{simple_block2d_forward.9} parent=85 // loop_header
                %s365 = sphi 0, %s369
                %p366 = scmp.ge.s32.totalorder %s365, 1
                %s370 = sphi %s349, %s349
                %s371 = sphi %s356, %s356
              $region89: #{simple_block2d_forward.9} parent=85 // loop_header_branch
                %368 = sbr.rel (%p366) target = $region93
              $region90: #{simple_block2d_forward.9} parent=85 // loop_body
                %v372 = vld [vmem:[%s370] sm:$0xff]
                %373 = vst [vmem:[%s371] sm:$0xff] %v372
                %v374 = vld [vmem:[%s370 + $0x8] sm:$0xff]
                %375 = vst [vmem:[%s371 + $0x10] sm:$0xff] %v374
                %v376 = vld [vmem:[%s370 + $0x10] sm:$0xff]
                %377 = vst [vmem:[%s371 + $0x20] sm:$0xff] %v376
              $region91: #{simple_block2d_forward.9} parent=85 // loop_footer
                %s369 = sadd.s32 1, %s365
              $region92: #{simple_block2d_forward.9} parent=85 // loop_footer_branch
                %364 = sbr.rel target = $region88
              $region93: #{simple_block2d_forward.9} parent=85 // loop_exit
                _
            $region86: #{simple_block2d_forward.9} parent=77 // pred_fallthru
              _
          $region78: #{simple_block2d_forward.9} parent=73 // pred_fallthru
            _
          %396 = vnop
        $region74: #{simple_block2d_forward.9} parent=65 // pred_fallthru
          _
      $region66: #{simple_block2d_forward.9} parent=5 // pred_fallthru
        _
      %p397 = scmp.le.s32.totalorder 2, %s9
      // Predicated region
      $region109: #{simple_block2d_forward.9} parent=5 // pred_check
        %p398 = pneg %p397
      $region110: #{simple_block2d_forward.9} parent=5 // pred_check_branch
        %400 = sbr.rel (%p398) target = $region112
      $region111: #{simple_block2d_forward.9} parent=5 // pred_region
        %s401 = ssub.s32 %s9, 2
        // Predicated region
        $region113: #{simple_block2d_forward.9} parent=111 // pred_check
          %p402 = pneg %p122
        $region114: #{simple_block2d_forward.9} parent=111 // pred_check_branch
          %404 = sbr.rel (%p402) target = $region116
        $region115: #{simple_block2d_forward.9} parent=111 // pred_region
          %s405 = sand.u32 %s107, 1
          %s406 = sand.u32 %s107, 1
          %s407 = smul.addr %s406, 24
          %s408 = scalar_lea.vmem [#allocation3], %s407
        $region116: #{simple_block2d_forward.9} parent=111 // pred_fallthru
          _
      $region112: #{simple_block2d_forward.9} parent=5 // pred_fallthru
        _
    $region6: #{simple_block2d_forward.9} parent=1 // loop_footer
      %s13 = sadd.s32 1, %s9
    $region7: #{simple_block2d_forward.9} parent=1 // loop_footer_branch
      %8 = sbr.rel target = $region3
    $region8: #{simple_block2d_forward.9} parent=1 // loop_exit
      _

</llo_original>
